<compile_context>
chip_gen: v5e
topology: v5e:2x2
jax: 0.10.0
libtpu: 0.0.40
codegen_flags: <defaults>
</compile_context>

<pallas_src>
import functools

import jax
import jax.numpy as jnp
from jax.experimental import pallas as pl
from jax.experimental.pallas import tpu as pltpu

NEG_SLOPE = 0.01  # F.leaky_relu default negative slope


def _gat_fused_kernel(z_ref, e_src_ref, e_dst_ref, bias_ref, o_ref, *,
                      num_heads, out_dim, mxu_bf16, score_bf16):
    """All heads fused; grid axis 0 tiles the destination (output) rows.

    z_ref     : [N, H*out_dim]   projected features of ALL source nodes (resident)
    e_src_ref : [H, N]           z_u . a_src[h]  (resident, dst-major row layout)
    e_dst_ref : [T, H]           z_v . a_dst[h]  (dst-row tile)
    bias_ref  : [T, N]  bf16     0 on edge u->v, -inf otherwise (adj^T tile)
    o_ref     : [T, H*out_dim]
    """
    score_dtype = jnp.bfloat16 if score_bf16 else jnp.float32
    mxu_dtype = jnp.bfloat16 if mxu_bf16 else jnp.float32

    z_all = z_ref[...]                                   # [N, H*D]
    e_src_all = e_src_ref[...].astype(score_dtype)       # [H, N]
    e_dst_all = e_dst_ref[...].astype(score_dtype)       # [T, H]
    bias = bias_ref[...].astype(score_dtype)             # [T, N] (0 / -inf)

    head_outs = []
    for hd in range(num_heads):                          # static unroll (small H)
        col = slice(hd * out_dim, (hd + 1) * out_dim)
        z_h = z_all[:, col].astype(mxu_dtype)            # [N, D]
        e_s = e_src_all[hd:hd + 1, :]                    # [1, N]
        e_d = e_dst_all[:, hd:hd + 1]                    # [T, 1]

        # dst-major scores: s[v, u] = e_dst[v] + e_src[u]
        s = e_d + e_s                                    # [T, N]
        s = jnp.maximum(s, NEG_SLOPE * s)                # leaky_relu (1 VALU op)
        s = s + bias                                     # mask off-edges -> -inf

        # softmax over incoming edges = lane-axis reduce (per dst row).
        m = jnp.max(s, axis=-1, keepdims=True)           # [T, 1]
        m = jnp.where(m > -jnp.inf, m, jnp.zeros_like(m))  # guard isolated rows
        p = jnp.exp(s - m)                               # [T, N], off-edges -> 0
        denom = jnp.sum(p.astype(jnp.float32), axis=-1, keepdims=True)
        denom = jnp.where(denom > 0.0, denom, 1.0)

        # deferred, EXACT normalization on the small [T, out_dim] result.
        out_un = jnp.dot(p.astype(mxu_dtype), z_h,
                         preferred_element_type=jnp.float32)   # [T, D]
        head_outs.append(out_un / denom)

    # Single lane-dense store of all heads (width = H*out_dim).
    # (For H*out_dim < 128 this is a partial store; production configs with
    #  H*out_dim >= 128 hit the unmasked-vst fast path.)
    o_ref[...] = jnp.concatenate(head_outs, axis=-1).astype(o_ref.dtype)


@functools.partial(jax.jit,
                   static_argnames=("merge", "block_dst", "mxu_bf16",
                                    "score_bf16", "vmem_limit_bytes"))
def multi_head_gat(h, fc_w, a_src, a_dst, adj, merge="cat", block_dst=None,
                   mxu_bf16=False, score_bf16=False, vmem_limit_bytes=None):
    """h: [N, in_dim], fc_w: [H, out_dim, in_dim], a_src/a_dst: [H, out_dim],
    adj: [N, N] with adj[u, v] != 0 iff directed edge u -> v.
    Returns [N, H*out_dim] for merge='cat', else scalar mean (as in the ref)."""
    N, in_dim = h.shape
    num_heads, out_dim, _ = fc_w.shape

    if block_dst is None:
        block_dst = min(N, 256)            # sweep / re-derive per TPU generation
    assert N % block_dst == 0 and (block_dst % 8 == 0 or block_dst == N)

    # ---- hoisted out of the grid loop: projection + per-head logits (plain XLA)
    # Pack per-head fc weights as [in_dim, H*out_dim] -> one wide matmul.
    w_packed = jnp.transpose(fc_w, (2, 0, 1)).reshape(in_dim, num_heads * out_dim)
    if mxu_bf16:
        z = jnp.dot(h.astype(jnp.bfloat16), w_packed.astype(jnp.bfloat16),
                    preferred_element_type=jnp.float32)
    else:
        z = jnp.dot(h, w_packed, preferred_element_type=jnp.float32,
                    precision=jax.lax.Precision.HIGHEST)
    z3 = z.reshape(N, num_heads, out_dim)
    # attn_fc([z_src || z_dst]) == z_src . a_src + z_dst . a_dst
    e_src = jnp.einsum("nhd,hd->hn", z3, a_src,
                       precision=jax.lax.Precision.HIGHEST)        # [H, N]
    e_dst = jnp.einsum("nhd,hd->nh", z3, a_dst,
                       precision=jax.lax.Precision.HIGHEST)        # [N, H]

    # Additive mask bias, dst-major (adj^T), bf16: halves the O(N^2) HBM stream
    # and replaces an in-kernel compare+select with a single add.
    bias = jnp.where(adj.T != 0, 0.0, -jnp.inf).astype(jnp.bfloat16)  # [N, N]

    z_in = z.astype(jnp.bfloat16) if mxu_bf16 else z

    kernel = functools.partial(
        _gat_fused_kernel,
        num_heads=num_heads, out_dim=out_dim,
        mxu_bf16=mxu_bf16, score_bf16=score_bf16)

    cp_kwargs = dict(dimension_semantics=("parallel",))
    if vmem_limit_bytes is not None:
        cp_kwargs["vmem_limit_bytes"] = vmem_limit_bytes

    out = pl.pallas_call(
        kernel,
        out_shape=jax.ShapeDtypeStruct((N, num_heads * out_dim), jnp.float32),
        grid_spec=pltpu.PrefetchScalarGridSpec(
            num_scalar_prefetch=0,
            grid=(N // block_dst,),
            in_specs=[
                pl.BlockSpec((N, num_heads * out_dim), lambda i: (0, 0)),  # z (all srcs)
                pl.BlockSpec((num_heads, N), lambda i: (0, 0)),            # e_src
                pl.BlockSpec((block_dst, num_heads), lambda i: (i, 0)),    # e_dst tile
                pl.BlockSpec((block_dst, N), lambda i: (i, 0)),            # bias tile
            ],
            out_specs=pl.BlockSpec((block_dst, num_heads * out_dim),
                                   lambda i: (i, 0)),
        ),
        compiler_params=pltpu.CompilerParams(**cp_kwargs),
    )(z_in, e_src, e_dst, bias)                            # [N, H*out_dim]

    if merge == "cat":
        return out
    # torch.mean(torch.stack(head_outs)) is a scalar mean over everything.
    return jnp.mean(out)


def _ref_multi_head_gat(h, fc_w, a_src, a_dst, adj, merge="cat"):
    """Pure-JAX reference of the same math (for correctness check)."""
    hp = jax.lax.Precision.HIGHEST
    outs = []
    for hd in range(fc_w.shape[0]):
        z = jnp.dot(h, fc_w[hd].T, precision=hp)
        s = jnp.dot(z, a_src[hd], precision=hp)[:, None] \
            + jnp.dot(z, a_dst[hd], precision=hp)[None, :]
        s = jnp.where(s > 0, s, NEG_SLOPE * s)
        s = jnp.where(adj > 0, s, -jnp.inf)
        alpha = jax.nn.softmax(s, axis=0)
        outs.append(jnp.dot(alpha.T, z, precision=hp))
    if merge == "cat":
        return jnp.concatenate(outs, axis=1)
    return jnp.mean(jnp.stack(outs))


def _xavier_normal(key, shape, gain):
    fan_out, fan_in = shape[-2], shape[-1]
    std = gain * (2.0 / (fan_in + fan_out)) ** 0.5
    return std * jax.random.normal(key, shape, dtype=jnp.float32)


if __name__ == "__main__":
    N, in_dim, out_dim, num_heads = 128, 32, 16, 4
    gain = 2.0 ** 0.5  # nn.init.calculate_gain('relu')

    key = jax.random.PRNGKey(0)
    k_h, k_adj, k_fc, k_attn = jax.random.split(key, 4)

    # Node features.
    h = jax.random.normal(k_h, (N, in_dim), dtype=jnp.float32)

    # Random directed graph with self-loops (so every node has >=1 in-edge).
    adj = (jax.random.uniform(k_adj, (N, N)) < 0.25).astype(jnp.float32)
    adj = jnp.maximum(adj, jnp.eye(N, dtype=jnp.float32))

    # Per-head parameters, xavier_normal_(gain=sqrt(2)) as in reset_parameters.
    fc_w = _xavier_normal(k_fc, (num_heads, out_dim, in_dim), gain)     # fc.weight
    attn_w = _xavier_normal(k_attn, (num_heads, 1, 2 * out_dim), gain)  # attn_fc.weight
    a_src = attn_w[:, 0, :out_dim]     # [H, out_dim]  (acts on src half of concat)
    a_dst = attn_w[:, 0, out_dim:]     # [H, out_dim]  (acts on dst half of concat)

    ref = _ref_multi_head_gat(h, fc_w, a_src, a_dst, adj, merge="cat")

    # --- f32 path (exact softmax normalization): strict check.
    out = multi_head_gat(h, fc_w, a_src, a_dst, adj, merge="cat")
    out = jax.block_until_ready(out)
    assert out.shape == (N, num_heads * out_dim), out.shape
    err = float(jnp.max(jnp.abs(out - ref)))
    assert err < 2e-2, err

    # --- bf16 fast path (v6e/v7x config): MXU operands + score math in bf16,
    #     row max / denom / final scale kept in f32.  Loose numeric check.
    out_fast = multi_head_gat(h, fc_w, a_src, a_dst, adj, merge="cat",
                              mxu_bf16=True, score_bf16=True)
    out_fast = jax.block_until_ready(out_fast)
    assert bool(jnp.all(jnp.isfinite(out_fast)))
    err_fast = float(jnp.max(jnp.abs(out_fast - ref)))
    assert err_fast < 0.25, err_fast

    print("KERNEL_OK")
</pallas_src>

<mosaic_0001>
module attributes {stable_mosaic.version = 11 : i64} {
  func.func @_gat_fused_kernel(%arg0: i32, %arg1: memref<128x64xf32, #tpu.memory_space<vmem>>, %arg2: memref<4x128xf32, #tpu.memory_space<vmem>>, %arg3: memref<128x4xf32, #tpu.memory_space<vmem>>, %arg4: memref<128x128xbf16, #tpu.memory_space<vmem>>, %arg5: memref<128x64xf32, #tpu.memory_space<vmem>>) attributes {dimension_semantics = [#tpu.dimension_semantics<parallel>], iteration_bounds = array<i64: 1>, scalar_prefetch = 0 : i64, scratch_operands = 0 : i64, tpu.core_type = #tpu.core_type<tc>, window_params = [{pipeline_mode = #tpu.pipeline_mode<synchronous>, transform_indices = @transform_0, window_bounds = array<i64: 128, 64>}, {pipeline_mode = #tpu.pipeline_mode<synchronous>, transform_indices = @transform_1, window_bounds = array<i64: 4, 128>}, {transform_indices = @transform_2, window_bounds = array<i64: 128, 4>}, {transform_indices = @transform_3, window_bounds = array<i64: 128, 128>}, {transform_indices = @transform_4, window_bounds = array<i64: 128, 64>}]} {
    %c0 = arith.constant 0 : index
    %c0_0 = arith.constant 0 : index
    %0 = vector.load %arg1[%c0, %c0_0] : memref<128x64xf32, #tpu.memory_space<vmem>>, vector<128x64xf32>
    %c0_1 = arith.constant 0 : index
    %c0_2 = arith.constant 0 : index
    %1 = vector.load %arg2[%c0_1, %c0_2] : memref<4x128xf32, #tpu.memory_space<vmem>>, vector<4x128xf32>
    %c0_3 = arith.constant 0 : index
    %c0_4 = arith.constant 0 : index
    %2 = vector.load %arg3[%c0_3, %c0_4] : memref<128x4xf32, #tpu.memory_space<vmem>>, vector<128x4xf32>
    %c0_5 = arith.constant 0 : index
    %c0_6 = arith.constant 0 : index
    %3 = vector.load %arg4[%c0_5, %c0_6] : memref<128x128xbf16, #tpu.memory_space<vmem>>, vector<128x128xbf16>
    %4 = arith.extf %3 : vector<128x128xbf16> to vector<128x128xf32>
    %5 = vector.extract_strided_slice %0 {offsets = [0, 0], sizes = [128, 16], strides = [1, 1]} : vector<128x64xf32> to vector<128x16xf32>
    %6 = vector.extract_strided_slice %1 {offsets = [0, 0], sizes = [1, 128], strides = [1, 1]} : vector<4x128xf32> to vector<1x128xf32>
    %7 = vector.extract_strided_slice %2 {offsets = [0, 0], sizes = [128, 1], strides = [1, 1]} : vector<128x4xf32> to vector<128x1xf32>
    %8 = vector.broadcast %7 : vector<128x1xf32> to vector<128x128xf32>
    %9 = vector.broadcast %6 : vector<1x128xf32> to vector<128x128xf32>
    %10 = arith.addf %8, %9 : vector<128x128xf32>
    %cst = arith.constant 0.00999999977 : f32
    %11 = vector.broadcast %cst : f32 to vector<128x128xf32>
    %12 = arith.mulf %11, %10 : vector<128x128xf32>
    %13 = arith.maximumf %10, %12 : vector<128x128xf32>
    %14 = arith.addf %13, %4 : vector<128x128xf32>
    %cst_7 = arith.constant dense<0xFF800000> : vector<128xf32>
    %15 = vector.multi_reduction <maximumf>, %14, %cst_7 [1] : vector<128x128xf32> to vector<128xf32>
    %16 = vector.shape_cast %15 : vector<128xf32> to vector<128x1xf32>
    %cst_8 = arith.constant 0xFF800000 : f32
    %17 = vector.broadcast %cst_8 : f32 to vector<128x1xf32>
    %18 = arith.cmpf ogt, %16, %17 : vector<128x1xf32>
    %cst_9 = arith.constant 0.000000e+00 : f32
    %19 = vector.broadcast %cst_9 : f32 to vector<128x1xf32>
    %20 = arith.select %18, %16, %19 : vector<128x1xi1>, vector<128x1xf32>
    %21 = vector.broadcast %20 : vector<128x1xf32> to vector<128x128xf32>
    %22 = arith.subf %14, %21 : vector<128x128xf32>
    %23 = math.exp %22 : vector<128x128xf32>
    %cst_10 = arith.constant dense<0.000000e+00> : vector<128xf32>
    %24 = vector.multi_reduction <add>, %23, %cst_10 [1] : vector<128x128xf32> to vector<128xf32>
    %25 = vector.shape_cast %24 : vector<128xf32> to vector<128x1xf32>
    %cst_11 = arith.constant 0.000000e+00 : f32
    %26 = vector.broadcast %cst_11 : f32 to vector<128x1xf32>
    %27 = arith.cmpf ogt, %25, %26 : vector<128x1xf32>
    %cst_12 = arith.constant 1.000000e+00 : f32
    %28 = vector.broadcast %cst_12 : f32 to vector<128x1xf32>
    %29 = arith.select %27, %25, %28 : vector<128x1xi1>, vector<128x1xf32>
    %cst_13 = arith.constant dense<0.000000e+00> : vector<128x16xf32>
    %30 = tpu.matmul %23, %5, %cst_13 {dimension_numbers = #tpu.dot_dimension_numbers<[1], [0], [0], [1], [0, 0, 1, 1], [], []>} : vector<128x128xf32>, vector<128x16xf32>, vector<128x16xf32> -> vector<128x16xf32>
    %31 = vector.broadcast %29 : vector<128x1xf32> to vector<128x16xf32>
    %32 = arith.divf %30, %31 : vector<128x16xf32>
    %33 = vector.extract_strided_slice %0 {offsets = [0, 16], sizes = [128, 16], strides = [1, 1]} : vector<128x64xf32> to vector<128x16xf32>
    %34 = vector.extract_strided_slice %1 {offsets = [1, 0], sizes = [1, 128], strides = [1, 1]} : vector<4x128xf32> to vector<1x128xf32>
    %35 = vector.extract_strided_slice %2 {offsets = [0, 1], sizes = [128, 1], strides = [1, 1]} : vector<128x4xf32> to vector<128x1xf32>
    %36 = vector.broadcast %35 : vector<128x1xf32> to vector<128x128xf32>
    %37 = vector.broadcast %34 : vector<1x128xf32> to vector<128x128xf32>
    %38 = arith.addf %36, %37 : vector<128x128xf32>
    %cst_14 = arith.constant 0.00999999977 : f32
    %39 = vector.broadcast %cst_14 : f32 to vector<128x128xf32>
    %40 = arith.mulf %39, %38 : vector<128x128xf32>
    %41 = arith.maximumf %38, %40 : vector<128x128xf32>
    %42 = arith.addf %41, %4 : vector<128x128xf32>
    %cst_15 = arith.constant dense<0xFF800000> : vector<128xf32>
    %43 = vector.multi_reduction <maximumf>, %42, %cst_15 [1] : vector<128x128xf32> to vector<128xf32>
    %44 = vector.shape_cast %43 : vector<128xf32> to vector<128x1xf32>
    %cst_16 = arith.constant 0xFF800000 : f32
    %45 = vector.broadcast %cst_16 : f32 to vector<128x1xf32>
    %46 = arith.cmpf ogt, %44, %45 : vector<128x1xf32>
    %cst_17 = arith.constant 0.000000e+00 : f32
    %47 = vector.broadcast %cst_17 : f32 to vector<128x1xf32>
    %48 = arith.select %46, %44, %47 : vector<128x1xi1>, vector<128x1xf32>
    %49 = vector.broadcast %48 : vector<128x1xf32> to vector<128x128xf32>
    %50 = arith.subf %42, %49 : vector<128x128xf32>
    %51 = math.exp %50 : vector<128x128xf32>
    %cst_18 = arith.constant dense<0.000000e+00> : vector<128xf32>
    %52 = vector.multi_reduction <add>, %51, %cst_18 [1] : vector<128x128xf32> to vector<128xf32>
    %53 = vector.shape_cast %52 : vector<128xf32> to vector<128x1xf32>
    %cst_19 = arith.constant 0.000000e+00 : f32
    %54 = vector.broadcast %cst_19 : f32 to vector<128x1xf32>
    %55 = arith.cmpf ogt, %53, %54 : vector<128x1xf32>
    %cst_20 = arith.constant 1.000000e+00 : f32
    %56 = vector.broadcast %cst_20 : f32 to vector<128x1xf32>
    %57 = arith.select %55, %53, %56 : vector<128x1xi1>, vector<128x1xf32>
    %cst_21 = arith.constant dense<0.000000e+00> : vector<128x16xf32>
    %58 = tpu.matmul %51, %33, %cst_21 {dimension_numbers = #tpu.dot_dimension_numbers<[1], [0], [0], [1], [0, 0, 1, 1], [], []>} : vector<128x128xf32>, vector<128x16xf32>, vector<128x16xf32> -> vector<128x16xf32>
    %59 = vector.broadcast %57 : vector<128x1xf32> to vector<128x16xf32>
    %60 = arith.divf %58, %59 : vector<128x16xf32>
    %61 = vector.extract_strided_slice %0 {offsets = [0, 32], sizes = [128, 16], strides = [1, 1]} : vector<128x64xf32> to vector<128x16xf32>
    %62 = vector.extract_strided_slice %1 {offsets = [2, 0], sizes = [1, 128], strides = [1, 1]} : vector<4x128xf32> to vector<1x128xf32>
    %63 = vector.extract_strided_slice %2 {offsets = [0, 2], sizes = [128, 1], strides = [1, 1]} : vector<128x4xf32> to vector<128x1xf32>
    %64 = vector.broadcast %63 : vector<128x1xf32> to vector<128x128xf32>
    %65 = vector.broadcast %62 : vector<1x128xf32> to vector<128x128xf32>
    %66 = arith.addf %64, %65 : vector<128x128xf32>
    %cst_22 = arith.constant 0.00999999977 : f32
    %67 = vector.broadcast %cst_22 : f32 to vector<128x128xf32>
    %68 = arith.mulf %67, %66 : vector<128x128xf32>
    %69 = arith.maximumf %66, %68 : vector<128x128xf32>
    %70 = arith.addf %69, %4 : vector<128x128xf32>
    %cst_23 = arith.constant dense<0xFF800000> : vector<128xf32>
    %71 = vector.multi_reduction <maximumf>, %70, %cst_23 [1] : vector<128x128xf32> to vector<128xf32>
    %72 = vector.shape_cast %71 : vector<128xf32> to vector<128x1xf32>
    %cst_24 = arith.constant 0xFF800000 : f32
    %73 = vector.broadcast %cst_24 : f32 to vector<128x1xf32>
    %74 = arith.cmpf ogt, %72, %73 : vector<128x1xf32>
    %cst_25 = arith.constant 0.000000e+00 : f32
    %75 = vector.broadcast %cst_25 : f32 to vector<128x1xf32>
    %76 = arith.select %74, %72, %75 : vector<128x1xi1>, vector<128x1xf32>
    %77 = vector.broadcast %76 : vector<128x1xf32> to vector<128x128xf32>
    %78 = arith.subf %70, %77 : vector<128x128xf32>
    %79 = math.exp %78 : vector<128x128xf32>
    %cst_26 = arith.constant dense<0.000000e+00> : vector<128xf32>
    %80 = vector.multi_reduction <add>, %79, %cst_26 [1] : vector<128x128xf32> to vector<128xf32>
    %81 = vector.shape_cast %80 : vector<128xf32> to vector<128x1xf32>
    %cst_27 = arith.constant 0.000000e+00 : f32
    %82 = vector.broadcast %cst_27 : f32 to vector<128x1xf32>
    %83 = arith.cmpf ogt, %81, %82 : vector<128x1xf32>
    %cst_28 = arith.constant 1.000000e+00 : f32
    %84 = vector.broadcast %cst_28 : f32 to vector<128x1xf32>
    %85 = arith.select %83, %81, %84 : vector<128x1xi1>, vector<128x1xf32>
    %cst_29 = arith.constant dense<0.000000e+00> : vector<128x16xf32>
    %86 = tpu.matmul %79, %61, %cst_29 {dimension_numbers = #tpu.dot_dimension_numbers<[1], [0], [0], [1], [0, 0, 1, 1], [], []>} : vector<128x128xf32>, vector<128x16xf32>, vector<128x16xf32> -> vector<128x16xf32>
    %87 = vector.broadcast %85 : vector<128x1xf32> to vector<128x16xf32>
    %88 = arith.divf %86, %87 : vector<128x16xf32>
    %89 = vector.extract_strided_slice %0 {offsets = [0, 48], sizes = [128, 16], strides = [1, 1]} : vector<128x64xf32> to vector<128x16xf32>
    %90 = vector.extract_strided_slice %1 {offsets = [3, 0], sizes = [1, 128], strides = [1, 1]} : vector<4x128xf32> to vector<1x128xf32>
    %91 = vector.extract_strided_slice %2 {offsets = [0, 3], sizes = [128, 1], strides = [1, 1]} : vector<128x4xf32> to vector<128x1xf32>
    %92 = vector.broadcast %91 : vector<128x1xf32> to vector<128x128xf32>
    %93 = vector.broadcast %90 : vector<1x128xf32> to vector<128x128xf32>
    %94 = arith.addf %92, %93 : vector<128x128xf32>
    %cst_30 = arith.constant 0.00999999977 : f32
    %95 = vector.broadcast %cst_30 : f32 to vector<128x128xf32>
    %96 = arith.mulf %95, %94 : vector<128x128xf32>
    %97 = arith.maximumf %94, %96 : vector<128x128xf32>
    %98 = arith.addf %97, %4 : vector<128x128xf32>
    %cst_31 = arith.constant dense<0xFF800000> : vector<128xf32>
    %99 = vector.multi_reduction <maximumf>, %98, %cst_31 [1] : vector<128x128xf32> to vector<128xf32>
    %100 = vector.shape_cast %99 : vector<128xf32> to vector<128x1xf32>
    %cst_32 = arith.constant 0xFF800000 : f32
    %101 = vector.broadcast %cst_32 : f32 to vector<128x1xf32>
    %102 = arith.cmpf ogt, %100, %101 : vector<128x1xf32>
    %cst_33 = arith.constant 0.000000e+00 : f32
    %103 = vector.broadcast %cst_33 : f32 to vector<128x1xf32>
    %104 = arith.select %102, %100, %103 : vector<128x1xi1>, vector<128x1xf32>
    %105 = vector.broadcast %104 : vector<128x1xf32> to vector<128x128xf32>
    %106 = arith.subf %98, %105 : vector<128x128xf32>
    %107 = math.exp %106 : vector<128x128xf32>
    %cst_34 = arith.constant dense<0.000000e+00> : vector<128xf32>
    %108 = vector.multi_reduction <add>, %107, %cst_34 [1] : vector<128x128xf32> to vector<128xf32>
    %109 = vector.shape_cast %108 : vector<128xf32> to vector<128x1xf32>
    %cst_35 = arith.constant 0.000000e+00 : f32
    %110 = vector.broadcast %cst_35 : f32 to vector<128x1xf32>
    %111 = arith.cmpf ogt, %109, %110 : vector<128x1xf32>
    %cst_36 = arith.constant 1.000000e+00 : f32
    %112 = vector.broadcast %cst_36 : f32 to vector<128x1xf32>
    %113 = arith.select %111, %109, %112 : vector<128x1xi1>, vector<128x1xf32>
    %cst_37 = arith.constant dense<0.000000e+00> : vector<128x16xf32>
    %114 = tpu.matmul %107, %89, %cst_37 {dimension_numbers = #tpu.dot_dimension_numbers<[1], [0], [0], [1], [0, 0, 1, 1], [], []>} : vector<128x128xf32>, vector<128x16xf32>, vector<128x16xf32> -> vector<128x16xf32>
    %115 = vector.broadcast %113 : vector<128x1xf32> to vector<128x16xf32>
    %116 = arith.divf %114, %115 : vector<128x16xf32>
    %117 = tpu.concatenate %32, %60, %88, %116 in 1 : vector<128x16xf32>, vector<128x16xf32>, vector<128x16xf32>, vector<128x16xf32> -> vector<128x64xf32>
    %c0_38 = arith.constant 0 : index
    %c0_39 = arith.constant 0 : index
    %118 = vector.load %arg5[%c0_38, %c0_39] : memref<128x64xf32, #tpu.memory_space<vmem>>, vector<128x64xf32>
    tpu.vector_store %arg5[%c0_38, %c0_39], %117 {strides = array<i32>} : memref<128x64xf32, #tpu.memory_space<vmem>>, vector<128x64xf32>,
    return
  }
  func.func @transform_0(%arg0: i32) -> (i32, i32) {
    %c0_i32 = arith.constant 0 : i32
    %c0_i32_0 = arith.constant 0 : i32
    %c0_i32_1 = arith.constant 0 : i32
    return %c0_i32, %c0_i32_0 : i32, i32
  }
  func.func @transform_1(%arg0: i32) -> (i32, i32) {
    %c0_i32 = arith.constant 0 : i32
    %c0_i32_0 = arith.constant 0 : i32
    %c0_i32_1 = arith.constant 0 : i32
    return %c0_i32, %c0_i32_0 : i32, i32
  }
  func.func @transform_2(%arg0: i32) -> (i32, i32) {
    %c0_i32 = arith.constant 0 : i32
    %c0_i32_0 = arith.constant 0 : i32
    return %arg0, %c0_i32 : i32, i32
  }
  func.func @transform_3(%arg0: i32) -> (i32, i32) {
    %c0_i32 = arith.constant 0 : i32
    %c0_i32_0 = arith.constant 0 : i32
    return %arg0, %c0_i32 : i32, i32
  }
  func.func @transform_4(%arg0: i32) -> (i32, i32) {
    %c0_i32 = arith.constant 0 : i32
    %c0_i32_0 = arith.constant 0 : i32
    return %arg0, %c0_i32 : i32, i32
  }
}

</mosaic_0001>

<llo_original>
// kernel: multi_head_gat.1
$region0: #{multi_head_gat.1}
  #allocation0 [shape = 'u32[]', space=smem, size = 0x4, offset = 0x4, fixed_abs, tag = 'smem constant byte address 0x4 - core index']
  #allocation1 [shape = 'u32[72,128]{1,0:T(1,128)}', space=vmem, size = 0x9000, scoped, tag = 'internal scratch']
  %s0 = inlined_call_operand.vmem [shape: f32[128,64], index: 0, kind: input, shape index: {}]
  %s1 = inlined_call_operand.vmem [shape: f32[4,128], index: 1, kind: input, shape index: {}]
  %s2 = inlined_call_operand.vmem [shape: f32[128,4], index: 2, kind: input, shape index: {}]
  %s3 = inlined_call_operand.vmem [shape: bf16[128,128], index: 3, kind: input, shape index: {}]
  %s4 = inlined_call_operand.vmem [shape: f32[128,64], index: 4, kind: output, shape index: {}]
  %s5 = sld [smem:[#allocation0]]
  $region26: #{multi_head_gat.1} parent=0
    _
  %s7 = ssub.s32 1, %s5
  %s8 = scalar_select 0, %s7, %s5
  // Predicated region
  $region2: #{multi_head_gat.1} parent=0 // pred_check
    _
  $region3: #{multi_head_gat.1} parent=0 // pred_check_branch
    %10 = sbr.rel (0) target = $region5
  $region4: #{multi_head_gat.1} parent=0 // pred_region
    _
  $region5: #{multi_head_gat.1} parent=0 // pred_fallthru
    _
  // Predicated region
  $region6: #{multi_head_gat.1} parent=0 // pred_check
    _
  $region7: #{multi_head_gat.1} parent=0 // pred_check_branch
    %12 = sbr.rel (0) target = $region9
  $region8: #{multi_head_gat.1} parent=0 // pred_region
    _
  $region9: #{multi_head_gat.1} parent=0 // pred_fallthru
    _
  // Predicated region
  $region10: #{multi_head_gat.1} parent=0 // pred_check
    _
  $region11: #{multi_head_gat.1} parent=0 // pred_check_branch
    %14 = sbr.rel (0) target = $region13
  $region12: #{multi_head_gat.1} parent=0 // pred_region
    _
  $region13: #{multi_head_gat.1} parent=0 // pred_fallthru
    _
  // Predicated region
  $region14: #{multi_head_gat.1} parent=0 // pred_check
    _
  $region15: #{multi_head_gat.1} parent=0 // pred_check_branch
    %16 = sbr.rel (0) target = $region17
  $region16: #{multi_head_gat.1} parent=0 // pred_region
    _
  $region17: #{multi_head_gat.1} parent=0 // pred_fallthru
    _
  %v17 = vld [vmem:[%s0] sm:$0xff]
  %v18 = vld [vmem:[%s0 + $0x8] sm:$0xff]
  %v19 = vld [vmem:[%s0 + $0x10] sm:$0xff]
  %v20 = vld [vmem:[%s0 + $0x18] sm:$0xff]
  %v21 = vld [vmem:[%s0 + $0x20] sm:$0xff]
  %v22 = vld [vmem:[%s0 + $0x28] sm:$0xff]
  %v23 = vld [vmem:[%s0 + $0x30] sm:$0xff]
  %v24 = vld [vmem:[%s0 + $0x38] sm:$0xff]
  %v25 = vld [vmem:[%s0 + $0x40] sm:$0xff]
  %v26 = vld [vmem:[%s0 + $0x48] sm:$0xff]
  %v27 = vld [vmem:[%s0 + $0x50] sm:$0xff]
  %v28 = vld [vmem:[%s0 + $0x58] sm:$0xff]
  %v29 = vld [vmem:[%s0 + $0x60] sm:$0xff]
  %v30 = vld [vmem:[%s0 + $0x68] sm:$0xff]
  %v31 = vld [vmem:[%s0 + $0x70] sm:$0xff]
  %v32 = vld [vmem:[%s0 + $0x78] sm:$0xff]
  %v33 = vld [vmem:[%s1] sm:$0xf]
  %v34 = vld [vmem:[%s2] sm:$0xff]
  %v35 = vld [vmem:[%s2 + $0x8] sm:$0xff]
  %v36 = vld [vmem:[%s2 + $0x10] sm:$0xff]
  %v37 = vld [vmem:[%s2 + $0x18] sm:$0xff]
  %v38 = vld [vmem:[%s2 + $0x20] sm:$0xff]
  %v39 = vld [vmem:[%s2 + $0x28] sm:$0xff]
  %v40 = vld [vmem:[%s2 + $0x30] sm:$0xff]
  %v41 = vld [vmem:[%s2 + $0x38] sm:$0xff]
  %v42 = vld [vmem:[%s2 + $0x40] sm:$0xff]
  %v43 = vld [vmem:[%s2 + $0x48] sm:$0xff]
  %v44 = vld [vmem:[%s2 + $0x50] sm:$0xff]
  %v45 = vld [vmem:[%s2 + $0x58] sm:$0xff]
  %v46 = vld [vmem:[%s2 + $0x60] sm:$0xff]
  %v47 = vld [vmem:[%s2 + $0x68] sm:$0xff]
  %v48 = vld [vmem:[%s2 + $0x70] sm:$0xff]
  %v49 = vld [vmem:[%s2 + $0x78] sm:$0xff]
  %v50 = vld [vmem:[%s3] sm:$0xf]
  %v51 = vld [vmem:[%s3 + $0x4] sm:$0xf]
  %v52 = vld [vmem:[%s3 + $0x8] sm:$0xf]
  %v53 = vld [vmem:[%s3 + $0xc] sm:$0xf]
  %v54 = vld [vmem:[%s3 + $0x10] sm:$0xf]
  %v55 = vld [vmem:[%s3 + $0x14] sm:$0xf]
  %v56 = vld [vmem:[%s3 + $0x18] sm:$0xf]
  %v57 = vld [vmem:[%s3 + $0x1c] sm:$0xf]
  %v58 = vld [vmem:[%s3 + $0x20] sm:$0xf]
  %v59 = vld [vmem:[%s3 + $0x24] sm:$0xf]
  %v60 = vld [vmem:[%s3 + $0x28] sm:$0xf]
  %v61 = vld [vmem:[%s3 + $0x2c] sm:$0xf]
  %v62 = vld [vmem:[%s3 + $0x30] sm:$0xf]
  %v63 = vld [vmem:[%s3 + $0x34] sm:$0xf]
  %v64 = vld [vmem:[%s3 + $0x38] sm:$0xf]
  %v65 = vld [vmem:[%s3 + $0x3c] sm:$0xf]
  %v66 = vunpack.c.l.bf16 %v50
  %v67 = vunpack.c.l.bf16 %v51
  %v68 = vunpack.c.l.bf16 %v52
  %v69 = vunpack.c.l.bf16 %v53
  %v70 = vunpack.c.l.bf16 %v54
  %v71 = vunpack.c.l.bf16 %v55
  %v72 = vunpack.c.l.bf16 %v56
  %v73 = vunpack.c.l.bf16 %v57
  %v74 = vunpack.c.l.bf16 %v58
  %v75 = vunpack.c.l.bf16 %v59
  %v76 = vunpack.c.l.bf16 %v60
  %v77 = vunpack.c.l.bf16 %v61
  %v78 = vunpack.c.l.bf16 %v62
  %v79 = vunpack.c.l.bf16 %v63
  %v80 = vunpack.c.l.bf16 %v64
  %v81 = vunpack.c.l.bf16 %v65
  %83 = vset.pattern.permute.xlu0 0
  %84 = vperm.xlu0 %83, %v34
  %v85 = vpop.permute.xlu0 %84
  %88 = vset.pattern.permute.xlu0 0
  %89 = vperm.xlu0 %88, %v35
  %v90 = vpop.permute.xlu0 %89
  %93 = vset.pattern.permute.xlu0 0
  %94 = vperm.xlu0 %93, %v36
  %v95 = vpop.permute.xlu0 %94
  %98 = vset.pattern.permute.xlu0 0
  %99 = vperm.xlu0 %98, %v37
  %v100 = vpop.permute.xlu0 %99
  %103 = vset.pattern.permute.xlu0 0
  %104 = vperm.xlu0 %103, %v38
  %v105 = vpop.permute.xlu0 %104
  %108 = vset.pattern.permute.xlu0 0
  %109 = vperm.xlu0 %108, %v39
  %v110 = vpop.permute.xlu0 %109
  %113 = vset.pattern.permute.xlu0 0
  %114 = vperm.xlu0 %113, %v40
  %v115 = vpop.permute.xlu0 %114
  %118 = vset.pattern.permute.xlu0 0
  %119 = vperm.xlu0 %118, %v41
  %v120 = vpop.permute.xlu0 %119
  %123 = vset.pattern.permute.xlu0 0
  %124 = vperm.xlu0 %123, %v42
  %v125 = vpop.permute.xlu0 %124
  %128 = vset.pattern.permute.xlu0 0
  %129 = vperm.xlu0 %128, %v43
  %v130 = vpop.permute.xlu0 %129
  %133 = vset.pattern.permute.xlu0 0
  %134 = vperm.xlu0 %133, %v44
  %v135 = vpop.permute.xlu0 %134
  %138 = vset.pattern.permute.xlu0 0
  %139 = vperm.xlu0 %138, %v45
  %v140 = vpop.permute.xlu0 %139
  %143 = vset.pattern.permute.xlu0 0
  %144 = vperm.xlu0 %143, %v46
  %v145 = vpop.permute.xlu0 %144
  %148 = vset.pattern.permute.xlu0 0
  %149 = vperm.xlu0 %148, %v47
  %v150 = vpop.permute.xlu0 %149
  %153 = vset.pattern.permute.xlu0 0
  %154 = vperm.xlu0 %153, %v48
  %v155 = vpop.permute.xlu0 %154
  %158 = vset.pattern.permute.xlu0 0
  %159 = vperm.xlu0 %158, %v49
  %v160 = vpop.permute.xlu0 %159
  %v162 = vperm.slane %v33, 0
  %v163 = vadd.f32 %v85, %v162
  %v164 = vadd.f32 %v90, %v162
  %v165 = vadd.f32 %v95, %v162
  %v166 = vadd.f32 %v100, %v162
  %v167 = vadd.f32 %v105, %v162
  %v168 = vadd.f32 %v110, %v162
  %v169 = vadd.f32 %v115, %v162
  %v170 = vadd.f32 %v120, %v162
  %v171 = vadd.f32 %v125, %v162
  %v172 = vadd.f32 %v130, %v162
  %v173 = vadd.f32 %v135, %v162
  %v174 = vadd.f32 %v140, %v162
  %v175 = vadd.f32 %v145, %v162
  %v176 = vadd.f32 %v150, %v162
  %v177 = vadd.f32 %v155, %v162
  %v178 = vadd.f32 %v160, %v162
  %v179 = vmul.f32 %v163, 0.01
  %v180 = vmul.f32 %v164, 0.01
  %v181 = vmul.f32 %v165, 0.01
  %v182 = vmul.f32 %v166, 0.01
  %v183 = vmul.f32 %v167, 0.01
  %v184 = vmul.f32 %v168, 0.01
  %v185 = vmul.f32 %v169, 0.01
  %v186 = vmul.f32 %v170, 0.01
  %v187 = vmul.f32 %v171, 0.01
  %v188 = vmul.f32 %v172, 0.01
  %v189 = vmul.f32 %v173, 0.01
  %v190 = vmul.f32 %v174, 0.01
  %v191 = vmul.f32 %v175, 0.01
  %v192 = vmul.f32 %v176, 0.01
  %v193 = vmul.f32 %v177, 0.01
  %v194 = vmul.f32 %v178, 0.01
  %v195 = vmax.f32 %v163, %v179
  %v196 = vmax.f32 %v164, %v180
  %v197 = vmax.f32 %v165, %v181
  %v198 = vmax.f32 %v166, %v182
  %v199 = vmax.f32 %v167, %v183
  %v200 = vmax.f32 %v168, %v184
  %v201 = vmax.f32 %v169, %v185
  %v202 = vmax.f32 %v170, %v186
  %v203 = vmax.f32 %v171, %v187
  %v204 = vmax.f32 %v172, %v188
  %v205 = vmax.f32 %v173, %v189
  %v206 = vmax.f32 %v174, %v190
  %v207 = vmax.f32 %v175, %v191
  %v208 = vmax.f32 %v176, %v192
  %v209 = vmax.f32 %v177, %v193
  %v210 = vmax.f32 %v178, %v194
  %v211 = vadd.f32 %v195, %v66
  %v212 = vadd.f32 %v196, %v67
  %v213 = vadd.f32 %v197, %v68
  %v214 = vadd.f32 %v198, %v69
  %v215 = vadd.f32 %v199, %v70
  %v216 = vadd.f32 %v200, %v71
  %v217 = vadd.f32 %v201, %v72
  %v218 = vadd.f32 %v202, %v73
  %v219 = vadd.f32 %v203, %v74
  %v220 = vadd.f32 %v204, %v75
  %v221 = vadd.f32 %v205, %v76
  %v222 = vadd.f32 %v206, %v77
  %v223 = vadd.f32 %v207, %v78
  %v224 = vadd.f32 %v208, %v79
  %v225 = vadd.f32 %v209, %v80
  %v226 = vadd.f32 %v210, %v81
  %227 = vmax.xlane.f32.xlu0 %v211
  %v228 = vpop.xlane.xlu0 %227
  %229 = vmax.xlane.f32.xlu0 %v212
  %v230 = vpop.xlane.xlu0 %229
  %231 = vmax.xlane.f32.xlu0 %v213
  %v232 = vpop.xlane.xlu0 %231
  %233 = vmax.xlane.f32.xlu0 %v214
  %v234 = vpop.xlane.xlu0 %233
  %235 = vmax.xlane.f32.xlu0 %v215
  %v236 = vpop.xlane.xlu0 %235
  %237 = vmax.xlane.f32.xlu0 %v216
  %v238 = vpop.xlane.xlu0 %237
  %239 = vmax.xlane.f32.xlu0 %v217
  %v240 = vpop.xlane.xlu0 %239
  %241 = vmax.xlane.f32.xlu0 %v218
  %v242 = vpop.xlane.xlu0 %241
  %243 = vmax.xlane.f32.xlu0 %v219
  %v244 = vpop.xlane.xlu0 %243
  %245 = vmax.xlane.f32.xlu0 %v220
  %v246 = vpop.xlane.xlu0 %245
  %247 = vmax.xlane.f32.xlu0 %v221
  %v248 = vpop.xlane.xlu0 %247
  %249 = vmax.xlane.f32.xlu0 %v222
  %v250 = vpop.xlane.xlu0 %249
  %251 = vmax.xlane.f32.xlu0 %v223
  %v252 = vpop.xlane.xlu0 %251
  %253 = vmax.xlane.f32.xlu0 %v224
  %v254 = vpop.xlane.xlu0 %253
  %255 = vmax.xlane.f32.xlu0 %v225
  %v256 = vpop.xlane.xlu0 %255
  %257 = vmax.xlane.f32.xlu0 %v226
  %v258 = vpop.xlane.xlu0 %257
  %vm259 = vcmp.gt.f32.partialorder %v228, -inf
  %vm260 = vcmp.gt.f32.partialorder %v230, -inf
  %vm261 = vcmp.gt.f32.partialorder %v232, -inf
  %vm262 = vcmp.gt.f32.partialorder %v234, -inf
  %vm263 = vcmp.gt.f32.partialorder %v236, -inf
  %vm264 = vcmp.gt.f32.partialorder %v238, -inf
  %vm265 = vcmp.gt.f32.partialorder %v240, -inf
  %vm266 = vcmp.gt.f32.partialorder %v242, -inf
  %vm267 = vcmp.gt.f32.partialorder %v244, -inf
  %vm268 = vcmp.gt.f32.partialorder %v246, -inf
  %vm269 = vcmp.gt.f32.partialorder %v248, -inf
  %vm270 = vcmp.gt.f32.partialorder %v250, -inf
  %vm271 = vcmp.gt.f32.partialorder %v252, -inf
  %vm272 = vcmp.gt.f32.partialorder %v254, -inf
  %vm273 = vcmp.gt.f32.partialorder %v256, -inf
  %vm274 = vcmp.gt.f32.partialorder %v258, -inf
  %v275 = vsel %vm259, %v228, 0.0
  %v276 = vsel %vm260, %v230, 0.0
  %v277 = vsel %vm261, %v232, 0.0
  %v278 = vsel %vm262, %v234, 0.0
  %v279 = vsel %vm263, %v236, 0.0
  %v280 = vsel %vm264, %v238, 0.0
  %v281 = vsel %vm265, %v240, 0.0
  %v282 = vsel %vm266, %v242, 0.0
  %v283 = vsel %vm267, %v244, 0.0
  %v284 = vsel %vm268, %v246, 0.0
  %v285 = vsel %vm269, %v248, 0.0
  %v286 = vsel %vm270, %v250, 0.0
  %v287 = vsel %vm271, %v252, 0.0
  %v288 = vsel %vm272, %v254, 0.0
  %v289 = vsel %vm273, %v256, 0.0
  %v290 = vsel %vm274, %v258, 0.0
  %v291 = vsub.f32 %v211, %v275
  %v292 = vsub.f32 %v212, %v276
  %v293 = vsub.f32 %v213, %v277
  %v294 = vsub.f32 %v214, %v278
  %v295 = vsub.f32 %v215, %v279
  %v296 = vsub.f32 %v216, %v280
  %v297 = vsub.f32 %v217, %v281
  %v298 = vsub.f32 %v218, %v282
  %v299 = vsub.f32 %v219, %v283
  %v300 = vsub.f32 %v220, %v284
  %v301 = vsub.f32 %v221, %v285
  %v302 = vsub.f32 %v222, %v286
  %v303 = vsub.f32 %v223, %v287
  %v304 = vsub.f32 %v224, %v288
  %v305 = vsub.f32 %v225, %v289
  %v306 = vsub.f32 %v226, %v290
  %v307 = vmul.f32 %v291, 1.442695
  %v308 = vpow.pop %v307
  %v309 = vmul.f32 %v292, 1.442695
  %v310 = vpow.pop %v309
  %v311 = vmul.f32 %v293, 1.442695
  %v312 = vpow.pop %v311
  %v313 = vmul.f32 %v294, 1.442695
  %v314 = vpow.pop %v313
  %v315 = vmul.f32 %v295, 1.442695
  %v316 = vpow.pop %v315
  %v317 = vmul.f32 %v296, 1.442695
  %v318 = vpow.pop %v317
  %v319 = vmul.f32 %v297, 1.442695
  %v320 = vpow.pop %v319
  %v321 = vmul.f32 %v298, 1.442695
  %v322 = vpow.pop %v321
  %v323 = vmul.f32 %v299, 1.442695
  %v324 = vpow.pop %v323
  %v325 = vmul.f32 %v300, 1.442695
  %v326 = vpow.pop %v325
  %v327 = vmul.f32 %v301, 1.442695
  %v328 = vpow.pop %v327
  %v329 = vmul.f32 %v302, 1.442695
  %v330 = vpow.pop %v329
  %v331 = vmul.f32 %v303, 1.442695
  %v332 = vpow.pop %v331
  %v333 = vmul.f32 %v304, 1.442695
  %v334 = vpow.pop %v333
  %v335 = vmul.f32 %v305, 1.442695
  %v336 = vpow.pop %v335
  %v337 = vmul.f32 %v306, 1.442695
  %v338 = vpow.pop %v337
  %339 = vadd.xlane.f32.xlu0 %v308
  %v340 = vpop.xlane.xlu0 %339
  %341 = vadd.xlane.f32.xlu0 %v310
  %v342 = vpop.xlane.xlu0 %341
  %343 = vadd.xlane.f32.xlu0 %v312
  %v344 = vpop.xlane.xlu0 %343
  %345 = vadd.xlane.f32.xlu0 %v314
  %v346 = vpop.xlane.xlu0 %345
  %347 = vadd.xlane.f32.xlu0 %v316
  %v348 = vpop.xlane.xlu0 %347
  %349 = vadd.xlane.f32.xlu0 %v318
  %v350 = vpop.xlane.xlu0 %349
  %351 = vadd.xlane.f32.xlu0 %v320
  %v352 = vpop.xlane.xlu0 %351
  %353 = vadd.xlane.f32.xlu0 %v322
  %v354 = vpop.xlane.xlu0 %353
  %355 = vadd.xlane.f32.xlu0 %v324
  %v356 = vpop.xlane.xlu0 %355
  %357 = vadd.xlane.f32.xlu0 %v326
  %v358 = vpop.xlane.xlu0 %357
  %359 = vadd.xlane.f32.xlu0 %v328
  %v360 = vpop.xlane.xlu0 %359
  %361 = vadd.xlane.f32.xlu0 %v330
  %v362 = vpop.xlane.xlu0 %361
  %363 = vadd.xlane.f32.xlu0 %v332
  %v364 = vpop.xlane.xlu0 %363
  %365 = vadd.xlane.f32.xlu0 %v334
  %v366 = vpop.xlane.xlu0 %365
  %367 = vadd.xlane.f32.xlu0 %v336
  %v368 = vpop.xlane.xlu0 %367
  %369 = vadd.xlane.f32.xlu0 %v338
  %v370 = vpop.xlane.xlu0 %369
  %vm371 = vcmp.gt.f32.partialorder %v340, 0.0
  %vm372 = vcmp.gt.f32.partialorder %v342, 0.0
  %vm373 = vcmp.gt.f32.partialorder %v344, 0.0
  %vm374 = vcmp.gt.f32.partialorder %v346, 0.0
  %vm375 = vcmp.gt.f32.partialorder %v348, 0.0
  %vm376 = vcmp.gt.f32.partialorder %v350, 0.0
  %vm377 = vcmp.gt.f32.partialorder %v352, 0.0
  %vm378 = vcmp.gt.f32.partialorder %v354, 0.0
  %vm379 = vcmp.gt.f32.partialorder %v356, 0.0
  %vm380 = vcmp.gt.f32.partialorder %v358, 0.0
  %vm381 = vcmp.gt.f32.partialorder %v360, 0.0
  %vm382 = vcmp.gt.f32.partialorder %v362, 0.0
  %vm383 = vcmp.gt.f32.partialorder %v364, 0.0
  %vm384 = vcmp.gt.f32.partialorder %v366, 0.0
  %vm385 = vcmp.gt.f32.partialorder %v368, 0.0
  %vm386 = vcmp.gt.f32.partialorder %v370, 0.0
  %v387 = vsel %vm371, %v340, 1.0
  %v388 = vsel %vm372, %v342, 1.0
  %v389 = vsel %vm373, %v344, 1.0
  %v390 = vsel %vm374, %v346, 1.0
  %v391 = vsel %vm375, %v348, 1.0
  %v392 = vsel %vm376, %v350, 1.0
  %v393 = vsel %vm377, %v352, 1.0
  %v394 = vsel %vm378, %v354, 1.0
  %v395 = vsel %vm379, %v356, 1.0
  %v396 = vsel %vm380, %v358, 1.0
  %v397 = vsel %vm381, %v360, 1.0
  %v398 = vsel %vm382, %v362, 1.0
  %v399 = vsel %vm383, %v364, 1.0
  %v400 = vsel %vm384, %v366, 1.0
  %v401 = vsel %vm385, %v368, 1.0
  %v402 = vsel %vm386, %v370, 1.0
  %403 = vmatpush.msra.mxu0 %v32
  %404 = vmatpush.msra.mxu0 %v31
  %405 = vmatpush.msra.mxu0 %v30
  %406 = vmatpush.msra.mxu0 %v29
  %407 = vmatpush.msra.mxu0 %v28
  %408 = vmatpush.msra.mxu0 %v27
  %409 = vmatpush.msra.mxu0 %v26
  %410 = vmatpush.msra.mxu0 %v25
  %411 = vmatpush.msra.mxu0 %v24
  %412 = vmatpush.msra.mxu0 %v23
  %413 = vmatpush.msra.mxu0 %v22
  %414 = vmatpush.msra.mxu0 %v21
  %415 = vmatpush.msra.mxu0 %v20
  %416 = vmatpush.msra.mxu0 %v19
  %417 = vmatpush.msra.mxu0 %v18
  %418 = vmatpush.msra.mxu0 %v17
  %419 = vmatmul.f32.gmra.mxu0 %v308
  %v420 = vpop.f32.mrf.mxu0
  %v421 = vadd.f32 0.0, %v420
  %422 = vmatmul.f32.gmra.mxu0 %v310
  %v423 = vpop.f32.mrf.mxu0
  %v424 = vadd.f32 0.0, %v423
  %425 = vmatmul.f32.gmra.mxu0 %v312
  %v426 = vpop.f32.mrf.mxu0
  %v427 = vadd.f32 0.0, %v426
  %428 = vmatmul.f32.gmra.mxu0 %v314
  %v429 = vpop.f32.mrf.mxu0
  %v430 = vadd.f32 0.0, %v429
  %431 = vmatmul.f32.gmra.mxu0 %v316
  %v432 = vpop.f32.mrf.mxu0
  %v433 = vadd.f32 0.0, %v432
  %434 = vmatmul.f32.gmra.mxu0 %v318
  %v435 = vpop.f32.mrf.mxu0
  %v436 = vadd.f32 0.0, %v435
  %437 = vmatmul.f32.gmra.mxu0 %v320
  %v438 = vpop.f32.mrf.mxu0
  %v439 = vadd.f32 0.0, %v438
  %440 = vmatmul.f32.gmra.mxu0 %v322
  %v441 = vpop.f32.mrf.mxu0
  %v442 = vadd.f32 0.0, %v441
  %443 = vmatmul.f32.gmra.mxu0 %v324
  %v444 = vpop.f32.mrf.mxu0
  %v445 = vadd.f32 0.0, %v444
  %446 = vmatmul.f32.gmra.mxu0 %v326
  %v447 = vpop.f32.mrf.mxu0
  %v448 = vadd.f32 0.0, %v447
  %449 = vmatmul.f32.gmra.mxu0 %v328
  %v450 = vpop.f32.mrf.mxu0
  %v451 = vadd.f32 0.0, %v450
  %452 = vmatmul.f32.gmra.mxu0 %v330
  %v453 = vpop.f32.mrf.mxu0
  %v454 = vadd.f32 0.0, %v453
  %455 = vmatmul.f32.gmra.mxu0 %v332
  %v456 = vpop.f32.mrf.mxu0
  %v457 = vadd.f32 0.0, %v456
  %458 = vmatmul.f32.gmra.mxu0 %v334
  %v459 = vpop.f32.mrf.mxu0
  %v460 = vadd.f32 0.0, %v459
  %461 = vmatmul.f32.gmra.mxu0 %v336
  %v462 = vpop.f32.mrf.mxu0
  %v463 = vadd.f32 0.0, %v462
  %464 = vmatmul.f32.gmra.mxu0 %v338
  %v465 = vpop.f32.mrf.mxu0
  %v466 = vadd.f32 0.0, %v465
  %467 = vdwg.mxu0
  %v468 = vrcp.pop %v387
  %v469 = vmul.f32 %v387, %v468
  %v470 = vsub.f32 1.0, %v469
  %v471 = vmul.f32 %v468, %v470
  %v472 = vadd.f32 %v468, %v471
  %vm473 = vweird.f32 %v387
  %vm474 = vweird.f32 %v468
  %vm475 = vmor %vm473, %vm474
  %v476 = vsel %vm475, %v468, %v472
  %v477 = vand.u32 2147483647, %v387
  %vm478 = vcmp.eq.f32.partialorder %v477, 8.507059e+37
  %v479 = vand.u32 %v387, 2147483648
  %v480 = vor.u32 1.1754944e-38, %v479
  %v481 = vsel %vm478, %v480, %v476
  %v482 = vmul.f32 %v421, %v481
  %v483 = vrcp.pop %v388
  %v484 = vmul.f32 %v388, %v483
  %v485 = vsub.f32 1.0, %v484
  %v486 = vmul.f32 %v483, %v485
  %v487 = vadd.f32 %v483, %v486
  %vm488 = vweird.f32 %v388
  %vm489 = vweird.f32 %v483
  %vm490 = vmor %vm488, %vm489
  %v491 = vsel %vm490, %v483, %v487
  %v492 = vand.u32 2147483647, %v388
  %vm493 = vcmp.eq.f32.partialorder %v492, 8.507059e+37
  %v494 = vand.u32 %v388, 2147483648
  %v495 = vor.u32 1.1754944e-38, %v494
  %v496 = vsel %vm493, %v495, %v491
  %v497 = vmul.f32 %v424, %v496
  %v498 = vrcp.pop %v389
  %v499 = vmul.f32 %v389, %v498
  %v500 = vsub.f32 1.0, %v499
  %v501 = vmul.f32 %v498, %v500
  %v502 = vadd.f32 %v498, %v501
  %vm503 = vweird.f32 %v389
  %vm504 = vweird.f32 %v498
  %vm505 = vmor %vm503, %vm504
  %v506 = vsel %vm505, %v498, %v502
  %v507 = vand.u32 2147483647, %v389
  %vm508 = vcmp.eq.f32.partialorder %v507, 8.507059e+37
  %v509 = vand.u32 %v389, 2147483648
  %v510 = vor.u32 1.1754944e-38, %v509
  %v511 = vsel %vm508, %v510, %v506
  %v512 = vmul.f32 %v427, %v511
  %v513 = vrcp.pop %v390
  %v514 = vmul.f32 %v390, %v513
  %v515 = vsub.f32 1.0, %v514
  %v516 = vmul.f32 %v513, %v515
  %v517 = vadd.f32 %v513, %v516
  %vm518 = vweird.f32 %v390
  %vm519 = vweird.f32 %v513
  %vm520 = vmor %vm518, %vm519
  %v521 = vsel %vm520, %v513, %v517
  %v522 = vand.u32 2147483647, %v390
  %vm523 = vcmp.eq.f32.partialorder %v522, 8.507059e+37
  %v524 = vand.u32 %v390, 2147483648
  %v525 = vor.u32 1.1754944e-38, %v524
  %v526 = vsel %vm523, %v525, %v521
  %v527 = vmul.f32 %v430, %v526
  %v528 = vrcp.pop %v391
  %v529 = vmul.f32 %v391, %v528
  %v530 = vsub.f32 1.0, %v529
  %v531 = vmul.f32 %v528, %v530
  %v532 = vadd.f32 %v528, %v531
  %vm533 = vweird.f32 %v391
  %vm534 = vweird.f32 %v528
  %vm535 = vmor %vm533, %vm534
  %v536 = vsel %vm535, %v528, %v532
  %v537 = vand.u32 2147483647, %v391
  %vm538 = vcmp.eq.f32.partialorder %v537, 8.507059e+37
  %v539 = vand.u32 %v391, 2147483648
  %v540 = vor.u32 1.1754944e-38, %v539
  %v541 = vsel %vm538, %v540, %v536
  %v542 = vmul.f32 %v433, %v541
  %v543 = vrcp.pop %v392
  %v544 = vmul.f32 %v392, %v543
  %v545 = vsub.f32 1.0, %v544
  %v546 = vmul.f32 %v543, %v545
  %v547 = vadd.f32 %v543, %v546
  %vm548 = vweird.f32 %v392
  %vm549 = vweird.f32 %v543
  %vm550 = vmor %vm548, %vm549
  %v551 = vsel %vm550, %v543, %v547
  %v552 = vand.u32 2147483647, %v392
  %vm553 = vcmp.eq.f32.partialorder %v552, 8.507059e+37
  %v554 = vand.u32 %v392, 2147483648
  %v555 = vor.u32 1.1754944e-38, %v554
  %v556 = vsel %vm553, %v555, %v551
  %v557 = vmul.f32 %v436, %v556
  %v558 = vrcp.pop %v393
  %v559 = vmul.f32 %v393, %v558
  %v560 = vsub.f32 1.0, %v559
  %v561 = vmul.f32 %v558, %v560
  %v562 = vadd.f32 %v558, %v561
  %vm563 = vweird.f32 %v393
  %vm564 = vweird.f32 %v558
  %vm565 = vmor %vm563, %vm564
  %v566 = vsel %vm565, %v558, %v562
  %v567 = vand.u32 2147483647, %v393
  %vm568 = vcmp.eq.f32.partialorder %v567, 8.507059e+37
  %v569 = vand.u32 %v393, 2147483648
  %v570 = vor.u32 1.1754944e-38, %v569
  %v571 = vsel %vm568, %v570, %v566
  %v572 = vmul.f32 %v439, %v571
  %v573 = vrcp.pop %v394
  %v574 = vmul.f32 %v394, %v573
  %v575 = vsub.f32 1.0, %v574
  %v576 = vmul.f32 %v573, %v575
  %v577 = vadd.f32 %v573, %v576
  %vm578 = vweird.f32 %v394
  %vm579 = vweird.f32 %v573
  %vm580 = vmor %vm578, %vm579
  %v581 = vsel %vm580, %v573, %v577
  %v582 = vand.u32 2147483647, %v394
  %vm583 = vcmp.eq.f32.partialorder %v582, 8.507059e+37
  %v584 = vand.u32 %v394, 2147483648
  %v585 = vor.u32 1.1754944e-38, %v584
  %v586 = vsel %vm583, %v585, %v581
  %v587 = vmul.f32 %v442, %v586
  %v588 = vrcp.pop %v395
  %v589 = vmul.f32 %v395, %v588
  %v590 = vsub.f32 1.0, %v589
  %v591 = vmul.f32 %v588, %v590
  %v592 = vadd.f32 %v588, %v591
  %vm593 = vweird.f32 %v395
  %vm594 = vweird.f32 %v588
  %vm595 = vmor %vm593, %vm594
  %v596 = vsel %vm595, %v588, %v592
  %v597 = vand.u32 2147483647, %v395
  %vm598 = vcmp.eq.f32.partialorder %v597, 8.507059e+37
  %v599 = vand.u32 %v395, 2147483648
  %v600 = vor.u32 1.1754944e-38, %v599
  %v601 = vsel %vm598, %v600, %v596
  %v602 = vmul.f32 %v445, %v601
  %v603 = vrcp.pop %v396
  %v604 = vmul.f32 %v396, %v603
  %v605 = vsub.f32 1.0, %v604
  %v606 = vmul.f32 %v603, %v605
  %v607 = vadd.f32 %v603, %v606
  %vm608 = vweird.f32 %v396
  %vm609 = vweird.f32 %v603
  %vm610 = vmor %vm608, %vm609
  %v611 = vsel %vm610, %v603, %v607
  %v612 = vand.u32 2147483647, %v396
  %vm613 = vcmp.eq.f32.partialorder %v612, 8.507059e+37
  %v614 = vand.u32 %v396, 2147483648
  %v615 = vor.u32 1.1754944e-38, %v614
  %v616 = vsel %vm613, %v615, %v611
  %v617 = vmul.f32 %v448, %v616
  %v618 = vrcp.pop %v397
  %v619 = vmul.f32 %v397, %v618
  %v620 = vsub.f32 1.0, %v619
  %v621 = vmul.f32 %v618, %v620
  %v622 = vadd.f32 %v618, %v621
  %vm623 = vweird.f32 %v397
  %vm624 = vweird.f32 %v618
  %vm625 = vmor %vm623, %vm624
  %v626 = vsel %vm625, %v618, %v622
  %v627 = vand.u32 2147483647, %v397
  %vm628 = vcmp.eq.f32.partialorder %v627, 8.507059e+37
  %v629 = vand.u32 %v397, 2147483648
  %v630 = vor.u32 1.1754944e-38, %v629
  %v631 = vsel %vm628, %v630, %v626
  %v632 = vmul.f32 %v451, %v631
  %v633 = vrcp.pop %v398
  %v634 = vmul.f32 %v398, %v633
  %v635 = vsub.f32 1.0, %v634
  %v636 = vmul.f32 %v633, %v635
  %v637 = vadd.f32 %v633, %v636
  %vm638 = vweird.f32 %v398
  %vm639 = vweird.f32 %v633
  %vm640 = vmor %vm638, %vm639
  %v641 = vsel %vm640, %v633, %v637
  %v642 = vand.u32 2147483647, %v398
  %vm643 = vcmp.eq.f32.partialorder %v642, 8.507059e+37
  %v644 = vand.u32 %v398, 2147483648
  %v645 = vor.u32 1.1754944e-38, %v644
  %v646 = vsel %vm643, %v645, %v641
  %v647 = vmul.f32 %v454, %v646
  %v648 = vrcp.pop %v399
  %v649 = vmul.f32 %v399, %v648
  %v650 = vsub.f32 1.0, %v649
  %v651 = vmul.f32 %v648, %v650
  %v652 = vadd.f32 %v648, %v651
  %vm653 = vweird.f32 %v399
  %vm654 = vweird.f32 %v648
  %vm655 = vmor %vm653, %vm654
  %v656 = vsel %vm655, %v648, %v652
  %v657 = vand.u32 2147483647, %v399
  %vm658 = vcmp.eq.f32.partialorder %v657, 8.507059e+37
  %v659 = vand.u32 %v399, 2147483648
  %v660 = vor.u32 1.1754944e-38, %v659
  %v661 = vsel %vm658, %v660, %v656
  %v662 = vmul.f32 %v457, %v661
  %v663 = vrcp.pop %v400
  %v664 = vmul.f32 %v400, %v663
  %v665 = vsub.f32 1.0, %v664
  %v666 = vmul.f32 %v663, %v665
  %v667 = vadd.f32 %v663, %v666
  %vm668 = vweird.f32 %v400
  %vm669 = vweird.f32 %v663
  %vm670 = vmor %vm668, %vm669
  %v671 = vsel %vm670, %v663, %v667
  %v672 = vand.u32 2147483647, %v400
  %vm673 = vcmp.eq.f32.partialorder %v672, 8.507059e+37
  %v674 = vand.u32 %v400, 2147483648
  %v675 = vor.u32 1.1754944e-38, %v674
  %v676 = vsel %vm673, %v675, %v671
  %v677 = vmul.f32 %v460, %v676
  %v678 = vrcp.pop %v401
  %v679 = vmul.f32 %v401, %v678
  %v680 = vsub.f32 1.0, %v679
  %v681 = vmul.f32 %v678, %v680
  %v682 = vadd.f32 %v678, %v681
  %vm683 = vweird.f32 %v401
  %vm684 = vweird.f32 %v678
  %vm685 = vmor %vm683, %vm684
  %v686 = vsel %vm685, %v678, %v682
  %v687 = vand.u32 2147483647, %v401
  %vm688 = vcmp.eq.f32.partialorder %v687, 8.507059e+37
  %v689 = vand.u32 %v401, 2147483648
  %v690 = vor.u32 1.1754944e-38, %v689
  %v691 = vsel %vm688, %v690, %v686
  %v692 = vmul.f32 %v463, %v691
  %v693 = vrcp.pop %v402
  %v694 = vmul.f32 %v402, %v693
  %v695 = vsub.f32 1.0, %v694
  %v696 = vmul.f32 %v693, %v695
  %v697 = vadd.f32 %v693, %v696
  %vm698 = vweird.f32 %v402
  %vm699 = vweird.f32 %v693
  %vm700 = vmor %vm698, %vm699
  %v701 = vsel %vm700, %v693, %v697
  %v702 = vand.u32 2147483647, %v402
  %vm703 = vcmp.eq.f32.partialorder %v702, 8.507059e+37
  %v704 = vand.u32 %v402, 2147483648
  %v705 = vor.u32 1.1754944e-38, %v704
  %v706 = vsel %vm703, %v705, %v701
  %v707 = vmul.f32 %v466, %v706
  %708 = vset.pattern.permute.xlu0 1
  %709 = vperm.xlu0 %708, %v34
  %v710 = vpop.permute.xlu0 %709
  %712 = vset.pattern.permute.xlu0 1
  %713 = vperm.xlu0 %712, %v35
  %v714 = vpop.permute.xlu0 %713
  %716 = vset.pattern.permute.xlu0 1
  %717 = vperm.xlu0 %716, %v36
  %v718 = vpop.permute.xlu0 %717
  %720 = vset.pattern.permute.xlu0 1
  %721 = vperm.xlu0 %720, %v37
  %v722 = vpop.permute.xlu0 %721
  %724 = vset.pattern.permute.xlu0 1
  %725 = vperm.xlu0 %724, %v38
  %v726 = vpop.permute.xlu0 %725
  %728 = vset.pattern.permute.xlu0 1
  %729 = vperm.xlu0 %728, %v39
  %v730 = vpop.permute.xlu0 %729
  %732 = vset.pattern.permute.xlu0 1
  %733 = vperm.xlu0 %732, %v40
  %v734 = vpop.permute.xlu0 %733
  %736 = vset.pattern.permute.xlu0 1
  %737 = vperm.xlu0 %736, %v41
  %v738 = vpop.permute.xlu0 %737
  %740 = vset.pattern.permute.xlu0 1
  %741 = vperm.xlu0 %740, %v42
  %v742 = vpop.permute.xlu0 %741
  %744 = vset.pattern.permute.xlu0 1
  %745 = vperm.xlu0 %744, %v43
  %v746 = vpop.permute.xlu0 %745
  %748 = vset.pattern.permute.xlu0 1
  %749 = vperm.xlu0 %748, %v44
  %v750 = vpop.permute.xlu0 %749
  %752 = vset.pattern.permute.xlu0 1
  %753 = vperm.xlu0 %752, %v45
  %v754 = vpop.permute.xlu0 %753
  %756 = vset.pattern.permute.xlu0 1
  %757 = vperm.xlu0 %756, %v46
  %v758 = vpop.permute.xlu0 %757
  %760 = vset.pattern.permute.xlu0 1
  %761 = vperm.xlu0 %760, %v47
  %v762 = vpop.permute.xlu0 %761
  %764 = vset.pattern.permute.xlu0 1
  %765 = vperm.xlu0 %764, %v48
  %v766 = vpop.permute.xlu0 %765
  %768 = vset.pattern.permute.xlu0 1
  %769 = vperm.xlu0 %768, %v49
  %v770 = vpop.permute.xlu0 %769
  %v772 = vperm.slane %v33, 1
  %v773 = vadd.f32 %v710, %v772
  %v774 = vadd.f32 %v714, %v772
  %v775 = vadd.f32 %v718, %v772
  %v776 = vadd.f32 %v722, %v772
  %v777 = vadd.f32 %v726, %v772
  %v778 = vadd.f32 %v730, %v772
  %v779 = vadd.f32 %v734, %v772
  %v780 = vadd.f32 %v738, %v772
  %v781 = vadd.f32 %v742, %v772
  %v782 = vadd.f32 %v746, %v772
  %v783 = vadd.f32 %v750, %v772
  %v784 = vadd.f32 %v754, %v772
  %v785 = vadd.f32 %v758, %v772
  %v786 = vadd.f32 %v762, %v772
  %v787 = vadd.f32 %v766, %v772
  %v788 = vadd.f32 %v770, %v772
  %v789 = vmul.f32 %v773, 0.01
  %v790 = vmul.f32 %v774, 0.01
  %v791 = vmul.f32 %v775, 0.01
  %v792 = vmul.f32 %v776, 0.01
  %v793 = vmul.f32 %v777, 0.01
  %v794 = vmul.f32 %v778, 0.01
  %v795 = vmul.f32 %v779, 0.01
  %v796 = vmul.f32 %v780, 0.01
  %v797 = vmul.f32 %v781, 0.01
  %v798 = vmul.f32 %v782, 0.01
  %v799 = vmul.f32 %v783, 0.01
  %v800 = vmul.f32 %v784, 0.01
  %v801 = vmul.f32 %v785, 0.01
  %v802 = vmul.f32 %v786, 0.01
  %v803 = vmul.f32 %v787, 0.01
  %v804 = vmul.f32 %v788, 0.01
  %v805 = vmax.f32 %v773, %v789
  %v806 = vmax.f32 %v774, %v790
  %v807 = vmax.f32 %v775, %v791
  %v808 = vmax.f32 %v776, %v792
  %v809 = vmax.f32 %v777, %v793
  %v810 = vmax.f32 %v778, %v794
  %v811 = vmax.f32 %v779, %v795
  %v812 = vmax.f32 %v780, %v796
  %v813 = vmax.f32 %v781, %v797
  %v814 = vmax.f32 %v782, %v798
  %v815 = vmax.f32 %v783, %v799
  %v816 = vmax.f32 %v784, %v800
  %v817 = vmax.f32 %v785, %v801
  %v818 = vmax.f32 %v786, %v802
  %v819 = vmax.f32 %v787, %v803
  %v820 = vmax.f32 %v788, %v804
  %v821 = vadd.f32 %v805, %v66
  %v822 = vadd.f32 %v806, %v67
  %v823 = vadd.f32 %v807, %v68
  %v824 = vadd.f32 %v808, %v69
  %v825 = vadd.f32 %v809, %v70
  %v826 = vadd.f32 %v810, %v71
  %v827 = vadd.f32 %v811, %v72
  %v828 = vadd.f32 %v812, %v73
  %v829 = vadd.f32 %v813, %v74
  %v830 = vadd.f32 %v814, %v75
  %v831 = vadd.f32 %v815, %v76
  %v832 = vadd.f32 %v816, %v77
  %v833 = vadd.f32 %v817, %v78
  %v834 = vadd.f32 %v818, %v79
  %v835 = vadd.f32 %v819, %v80
  %v836 = vadd.f32 %v820, %v81
  %837 = vmax.xlane.f32.xlu0 %v821
  %v838 = vpop.xlane.xlu0 %837
  %839 = vmax.xlane.f32.xlu0 %v822
  %v840 = vpop.xlane.xlu0 %839
  %841 = vmax.xlane.f32.xlu0 %v823
  %v842 = vpop.xlane.xlu0 %841
  %843 = vmax.xlane.f32.xlu0 %v824
  %v844 = vpop.xlane.xlu0 %843
  %845 = vmax.xlane.f32.xlu0 %v825
  %v846 = vpop.xlane.xlu0 %845
  %847 = vmax.xlane.f32.xlu0 %v826
  %v848 = vpop.xlane.xlu0 %847
  %849 = vmax.xlane.f32.xlu0 %v827
  %v850 = vpop.xlane.xlu0 %849
  %851 = vmax.xlane.f32.xlu0 %v828
  %v852 = vpop.xlane.xlu0 %851
  %853 = vmax.xlane.f32.xlu0 %v829
  %v854 = vpop.xlane.xlu0 %853
  %855 = vmax.xlane.f32.xlu0 %v830
  %v856 = vpop.xlane.xlu0 %855
  %857 = vmax.xlane.f32.xlu0 %v831
  %v858 = vpop.xlane.xlu0 %857
  %859 = vmax.xlane.f32.xlu0 %v832
  %v860 = vpop.xlane.xlu0 %859
  %861 = vmax.xlane.f32.xlu0 %v833
  %v862 = vpop.xlane.xlu0 %861
  %863 = vmax.xlane.f32.xlu0 %v834
  %v864 = vpop.xlane.xlu0 %863
  %865 = vmax.xlane.f32.xlu0 %v835
  %v866 = vpop.xlane.xlu0 %865
  %867 = vmax.xlane.f32.xlu0 %v836
  %v868 = vpop.xlane.xlu0 %867
  %vm869 = vcmp.gt.f32.partialorder %v838, -inf
  %vm870 = vcmp.gt.f32.partialorder %v840, -inf
  %vm871 = vcmp.gt.f32.partialorder %v842, -inf
  %vm872 = vcmp.gt.f32.partialorder %v844, -inf
  %vm873 = vcmp.gt.f32.partialorder %v846, -inf
  %vm874 = vcmp.gt.f32.partialorder %v848, -inf
  %vm875 = vcmp.gt.f32.partialorder %v850, -inf
  %vm876 = vcmp.gt.f32.partialorder %v852, -inf
  %vm877 = vcmp.gt.f32.partialorder %v854, -inf
  %vm878 = vcmp.gt.f32.partialorder %v856, -inf
  %vm879 = vcmp.gt.f32.partialorder %v858, -inf
  %vm880 = vcmp.gt.f32.partialorder %v860, -inf
  %vm881 = vcmp.gt.f32.partialorder %v862, -inf
  %vm882 = vcmp.gt.f32.partialorder %v864, -inf
  %vm883 = vcmp.gt.f32.partialorder %v866, -inf
  %vm884 = vcmp.gt.f32.partialorder %v868, -inf
  %v885 = vsel %vm869, %v838, 0.0
  %v886 = vsel %vm870, %v840, 0.0
  %v887 = vsel %vm871, %v842, 0.0
  %v888 = vsel %vm872, %v844, 0.0
  %v889 = vsel %vm873, %v846, 0.0
  %v890 = vsel %vm874, %v848, 0.0
  %v891 = vsel %vm875, %v850, 0.0
  %v892 = vsel %vm876, %v852, 0.0
  %v893 = vsel %vm877, %v854, 0.0
  %v894 = vsel %vm878, %v856, 0.0
  %v895 = vsel %vm879, %v858, 0.0
  %v896 = vsel %vm880, %v860, 0.0
  %v897 = vsel %vm881, %v862, 0.0
  %v898 = vsel %vm882, %v864, 0.0
  %v899 = vsel %vm883, %v866, 0.0
  %v900 = vsel %vm884, %v868, 0.0
  %v901 = vsub.f32 %v821, %v885
  %v902 = vsub.f32 %v822, %v886
  %v903 = vsub.f32 %v823, %v887
  %v904 = vsub.f32 %v824, %v888
  %v905 = vsub.f32 %v825, %v889
  %v906 = vsub.f32 %v826, %v890
  %v907 = vsub.f32 %v827, %v891
  %v908 = vsub.f32 %v828, %v892
  %v909 = vsub.f32 %v829, %v893
  %v910 = vsub.f32 %v830, %v894
  %v911 = vsub.f32 %v831, %v895
  %v912 = vsub.f32 %v832, %v896
  %v913 = vsub.f32 %v833, %v897
  %v914 = vsub.f32 %v834, %v898
  %v915 = vsub.f32 %v835, %v899
  %v916 = vsub.f32 %v836, %v900
  %v917 = vmul.f32 %v901, 1.442695
  %v918 = vpow.pop %v917
  %v919 = vmul.f32 %v902, 1.442695
  %v920 = vpow.pop %v919
  %v921 = vmul.f32 %v903, 1.442695
  %v922 = vpow.pop %v921
  %v923 = vmul.f32 %v904, 1.442695
  %v924 = vpow.pop %v923
  %v925 = vmul.f32 %v905, 1.442695
  %v926 = vpow.pop %v925
  %v927 = vmul.f32 %v906, 1.442695
  %v928 = vpow.pop %v927
  %v929 = vmul.f32 %v907, 1.442695
  %v930 = vpow.pop %v929
  %v931 = vmul.f32 %v908, 1.442695
  %v932 = vpow.pop %v931
  %v933 = vmul.f32 %v909, 1.442695
  %v934 = vpow.pop %v933
  %v935 = vmul.f32 %v910, 1.442695
  %v936 = vpow.pop %v935
  %v937 = vmul.f32 %v911, 1.442695
  %v938 = vpow.pop %v937
  %v939 = vmul.f32 %v912, 1.442695
  %v940 = vpow.pop %v939
  %v941 = vmul.f32 %v913, 1.442695
  %v942 = vpow.pop %v941
  %v943 = vmul.f32 %v914, 1.442695
  %v944 = vpow.pop %v943
  %v945 = vmul.f32 %v915, 1.442695
  %v946 = vpow.pop %v945
  %v947 = vmul.f32 %v916, 1.442695
  %v948 = vpow.pop %v947
  %949 = vadd.xlane.f32.xlu0 %v918
  %v950 = vpop.xlane.xlu0 %949
  %951 = vadd.xlane.f32.xlu0 %v920
  %v952 = vpop.xlane.xlu0 %951
  %953 = vadd.xlane.f32.xlu0 %v922
  %v954 = vpop.xlane.xlu0 %953
  %955 = vadd.xlane.f32.xlu0 %v924
  %v956 = vpop.xlane.xlu0 %955
  %957 = vadd.xlane.f32.xlu0 %v926
  %v958 = vpop.xlane.xlu0 %957
  %959 = vadd.xlane.f32.xlu0 %v928
  %v960 = vpop.xlane.xlu0 %959
  %961 = vadd.xlane.f32.xlu0 %v930
  %v962 = vpop.xlane.xlu0 %961
  %963 = vadd.xlane.f32.xlu0 %v932
  %v964 = vpop.xlane.xlu0 %963
  %965 = vadd.xlane.f32.xlu0 %v934
  %v966 = vpop.xlane.xlu0 %965
  %967 = vadd.xlane.f32.xlu0 %v936
  %v968 = vpop.xlane.xlu0 %967
  %969 = vadd.xlane.f32.xlu0 %v938
  %v970 = vpop.xlane.xlu0 %969
  %971 = vadd.xlane.f32.xlu0 %v940
  %v972 = vpop.xlane.xlu0 %971
  %973 = vadd.xlane.f32.xlu0 %v942
  %v974 = vpop.xlane.xlu0 %973
  %975 = vadd.xlane.f32.xlu0 %v944
  %v976 = vpop.xlane.xlu0 %975
  %977 = vadd.xlane.f32.xlu0 %v946
  %v978 = vpop.xlane.xlu0 %977
  %979 = vadd.xlane.f32.xlu0 %v948
  %v980 = vpop.xlane.xlu0 %979
  %vm981 = vcmp.gt.f32.partialorder %v950, 0.0
  %vm982 = vcmp.gt.f32.partialorder %v952, 0.0
  %vm983 = vcmp.gt.f32.partialorder %v954, 0.0
  %vm984 = vcmp.gt.f32.partialorder %v956, 0.0
  %vm985 = vcmp.gt.f32.partialorder %v958, 0.0
  %vm986 = vcmp.gt.f32.partialorder %v960, 0.0
  %vm987 = vcmp.gt.f32.partialorder %v962, 0.0
  %vm988 = vcmp.gt.f32.partialorder %v964, 0.0
  %vm989 = vcmp.gt.f32.partialorder %v966, 0.0
  %vm990 = vcmp.gt.f32.partialorder %v968, 0.0
  %vm991 = vcmp.gt.f32.partialorder %v970, 0.0
  %vm992 = vcmp.gt.f32.partialorder %v972, 0.0
  %vm993 = vcmp.gt.f32.partialorder %v974, 0.0
  %vm994 = vcmp.gt.f32.partialorder %v976, 0.0
  %vm995 = vcmp.gt.f32.partialorder %v978, 0.0
  %vm996 = vcmp.gt.f32.partialorder %v980, 0.0
  %v997 = vsel %vm981, %v950, 1.0
  %v998 = vsel %vm982, %v952, 1.0
  %v999 = vsel %vm983, %v954, 1.0
  %v1000 = vsel %vm984, %v956, 1.0
  %v1001 = vsel %vm985, %v958, 1.0
  %v1002 = vsel %vm986, %v960, 1.0
  %v1003 = vsel %vm987, %v962, 1.0
  %v1004 = vsel %vm988, %v964, 1.0
  %v1005 = vsel %vm989, %v966, 1.0
  %v1006 = vsel %vm990, %v968, 1.0
  %v1007 = vsel %vm991, %v970, 1.0
  %v1008 = vsel %vm992, %v972, 1.0
  %v1009 = vsel %vm993, %v974, 1.0
  %v1010 = vsel %vm994, %v976, 1.0
  %v1011 = vsel %vm995, %v978, 1.0
  %v1012 = vsel %vm996, %v980, 1.0
  %1029 = vrot.lane.b32.xlu0 %v17, 112
  %v1030 = vpop.permute.xlu0 %1029
  %1031 = vrot.lane.b32.xlu0 %v18, 112
  %v1032 = vpop.permute.xlu0 %1031
  %1033 = vrot.lane.b32.xlu0 %v19, 112
  %v1034 = vpop.permute.xlu0 %1033
  %1035 = vrot.lane.b32.xlu0 %v20, 112
  %v1036 = vpop.permute.xlu0 %1035
  %1037 = vrot.lane.b32.xlu0 %v21, 112
  %v1038 = vpop.permute.xlu0 %1037
  %1039 = vrot.lane.b32.xlu0 %v22, 112
  %v1040 = vpop.permute.xlu0 %1039
  %1041 = vrot.lane.b32.xlu0 %v23, 112
  %v1042 = vpop.permute.xlu0 %1041
  %1043 = vrot.lane.b32.xlu0 %v24, 112
  %v1044 = vpop.permute.xlu0 %1043
  %1045 = vrot.lane.b32.xlu0 %v25, 112
  %v1046 = vpop.permute.xlu0 %1045
  %1047 = vrot.lane.b32.xlu0 %v26, 112
  %v1048 = vpop.permute.xlu0 %1047
  %1049 = vrot.lane.b32.xlu0 %v27, 112
  %v1050 = vpop.permute.xlu0 %1049
  %1051 = vrot.lane.b32.xlu0 %v28, 112
  %v1052 = vpop.permute.xlu0 %1051
  %1053 = vrot.lane.b32.xlu0 %v29, 112
  %v1054 = vpop.permute.xlu0 %1053
  %1055 = vrot.lane.b32.xlu0 %v30, 112
  %v1056 = vpop.permute.xlu0 %1055
  %1057 = vrot.lane.b32.xlu0 %v31, 112
  %v1058 = vpop.permute.xlu0 %1057
  %1059 = vrot.lane.b32.xlu0 %v32, 112
  %v1060 = vpop.permute.xlu0 %1059
  %1077 = vmatpush.msra.mxu0 %v1060
  %1078 = vmatpush.msra.mxu0 %v1058
  %1079 = vmatpush.msra.mxu0 %v1056
  %1080 = vmatpush.msra.mxu0 %v1054
  %1081 = vmatpush.msra.mxu0 %v1052
  %1082 = vmatpush.msra.mxu0 %v1050
  %1083 = vmatpush.msra.mxu0 %v1048
  %1084 = vmatpush.msra.mxu0 %v1046
  %1085 = vmatpush.msra.mxu0 %v1044
  %1086 = vmatpush.msra.mxu0 %v1042
  %1087 = vmatpush.msra.mxu0 %v1040
  %1088 = vmatpush.msra.mxu0 %v1038
  %1089 = vmatpush.msra.mxu0 %v1036
  %1090 = vmatpush.msra.mxu0 %v1034
  %1091 = vmatpush.msra.mxu0 %v1032
  %1092 = vmatpush.msra.mxu0 %v1030
  %1093 = vmatmul.f32.gmra.mxu0 %v918
  %v1094 = vpop.f32.mrf.mxu0
  %v1095 = vadd.f32 0.0, %v1094
  %1096 = vmatmul.f32.gmra.mxu0 %v920
  %v1097 = vpop.f32.mrf.mxu0
  %v1098 = vadd.f32 0.0, %v1097
  %1099 = vmatmul.f32.gmra.mxu0 %v922
  %v1100 = vpop.f32.mrf.mxu0
  %v1101 = vadd.f32 0.0, %v1100
  %1102 = vmatmul.f32.gmra.mxu0 %v924
  %v1103 = vpop.f32.mrf.mxu0
  %v1104 = vadd.f32 0.0, %v1103
  %1105 = vmatmul.f32.gmra.mxu0 %v926
  %v1106 = vpop.f32.mrf.mxu0
  %v1107 = vadd.f32 0.0, %v1106
  %1108 = vmatmul.f32.gmra.mxu0 %v928
  %v1109 = vpop.f32.mrf.mxu0
  %v1110 = vadd.f32 0.0, %v1109
  %1111 = vmatmul.f32.gmra.mxu0 %v930
  %v1112 = vpop.f32.mrf.mxu0
  %v1113 = vadd.f32 0.0, %v1112
  %1114 = vmatmul.f32.gmra.mxu0 %v932
  %v1115 = vpop.f32.mrf.mxu0
  %v1116 = vadd.f32 0.0, %v1115
  %1117 = vmatmul.f32.gmra.mxu0 %v934
  %v1118 = vpop.f32.mrf.mxu0
  %v1119 = vadd.f32 0.0, %v1118
  %1120 = vmatmul.f32.gmra.mxu0 %v936
  %v1121 = vpop.f32.mrf.mxu0
  %v1122 = vadd.f32 0.0, %v1121
  %1123 = vmatmul.f32.gmra.mxu0 %v938
  %v1124 = vpop.f32.mrf.mxu0
  %v1125 = vadd.f32 0.0, %v1124
  %1126 = vmatmul.f32.gmra.mxu0 %v940
  %v1127 = vpop.f32.mrf.mxu0
  %v1128 = vadd.f32 0.0, %v1127
  %1129 = vmatmul.f32.gmra.mxu0 %v942
  %v1130 = vpop.f32.mrf.mxu0
  %v1131 = vadd.f32 0.0, %v1130
  %1132 = vmatmul.f32.gmra.mxu0 %v944
  %v1133 = vpop.f32.mrf.mxu0
  %v1134 = vadd.f32 0.0, %v1133
  %1135 = vmatmul.f32.gmra.mxu0 %v946
  %v1136 = vpop.f32.mrf.mxu0
  %v1137 = vadd.f32 0.0, %v1136
  %1138 = vmatmul.f32.gmra.mxu0 %v948
  %v1139 = vpop.f32.mrf.mxu0
  %v1140 = vadd.f32 0.0, %v1139
  %1141 = vdwg.mxu0
  %v1142 = vrcp.pop %v997
  %v1143 = vmul.f32 %v997, %v1142
  %v1144 = vsub.f32 1.0, %v1143
  %v1145 = vmul.f32 %v1142, %v1144
  %v1146 = vadd.f32 %v1142, %v1145
  %vm1147 = vweird.f32 %v997
  %vm1148 = vweird.f32 %v1142
  %vm1149 = vmor %vm1147, %vm1148
  %v1150 = vsel %vm1149, %v1142, %v1146
  %v1151 = vand.u32 2147483647, %v997
  %vm1152 = vcmp.eq.f32.partialorder %v1151, 8.507059e+37
  %v1153 = vand.u32 %v997, 2147483648
  %v1154 = vor.u32 1.1754944e-38, %v1153
  %v1155 = vsel %vm1152, %v1154, %v1150
  %v1156 = vmul.f32 %v1095, %v1155
  %v1157 = vrcp.pop %v998
  %v1158 = vmul.f32 %v998, %v1157
  %v1159 = vsub.f32 1.0, %v1158
  %v1160 = vmul.f32 %v1157, %v1159
  %v1161 = vadd.f32 %v1157, %v1160
  %vm1162 = vweird.f32 %v998
  %vm1163 = vweird.f32 %v1157
  %vm1164 = vmor %vm1162, %vm1163
  %v1165 = vsel %vm1164, %v1157, %v1161
  %v1166 = vand.u32 2147483647, %v998
  %vm1167 = vcmp.eq.f32.partialorder %v1166, 8.507059e+37
  %v1168 = vand.u32 %v998, 2147483648
  %v1169 = vor.u32 1.1754944e-38, %v1168
  %v1170 = vsel %vm1167, %v1169, %v1165
  %v1171 = vmul.f32 %v1098, %v1170
  %v1172 = vrcp.pop %v999
  %v1173 = vmul.f32 %v999, %v1172
  %v1174 = vsub.f32 1.0, %v1173
  %v1175 = vmul.f32 %v1172, %v1174
  %v1176 = vadd.f32 %v1172, %v1175
  %vm1177 = vweird.f32 %v999
  %vm1178 = vweird.f32 %v1172
  %vm1179 = vmor %vm1177, %vm1178
  %v1180 = vsel %vm1179, %v1172, %v1176
  %v1181 = vand.u32 2147483647, %v999
  %vm1182 = vcmp.eq.f32.partialorder %v1181, 8.507059e+37
  %v1183 = vand.u32 %v999, 2147483648
  %v1184 = vor.u32 1.1754944e-38, %v1183
  %v1185 = vsel %vm1182, %v1184, %v1180
  %v1186 = vmul.f32 %v1101, %v1185
  %v1187 = vrcp.pop %v1000
  %v1188 = vmul.f32 %v1000, %v1187
  %v1189 = vsub.f32 1.0, %v1188
  %v1190 = vmul.f32 %v1187, %v1189
  %v1191 = vadd.f32 %v1187, %v1190
  %vm1192 = vweird.f32 %v1000
  %vm1193 = vweird.f32 %v1187
  %vm1194 = vmor %vm1192, %vm1193
  %v1195 = vsel %vm1194, %v1187, %v1191
  %v1196 = vand.u32 2147483647, %v1000
  %vm1197 = vcmp.eq.f32.partialorder %v1196, 8.507059e+37
  %v1198 = vand.u32 %v1000, 2147483648
  %v1199 = vor.u32 1.1754944e-38, %v1198
  %v1200 = vsel %vm1197, %v1199, %v1195
  %v1201 = vmul.f32 %v1104, %v1200
  %v1202 = vrcp.pop %v1001
  %v1203 = vmul.f32 %v1001, %v1202
  %v1204 = vsub.f32 1.0, %v1203
  %v1205 = vmul.f32 %v1202, %v1204
  %v1206 = vadd.f32 %v1202, %v1205
  %vm1207 = vweird.f32 %v1001
  %vm1208 = vweird.f32 %v1202
  %vm1209 = vmor %vm1207, %vm1208
  %v1210 = vsel %vm1209, %v1202, %v1206
  %v1211 = vand.u32 2147483647, %v1001
  %vm1212 = vcmp.eq.f32.partialorder %v1211, 8.507059e+37
  %v1213 = vand.u32 %v1001, 2147483648
  %v1214 = vor.u32 1.1754944e-38, %v1213
  %v1215 = vsel %vm1212, %v1214, %v1210
  %v1216 = vmul.f32 %v1107, %v1215
  %v1217 = vrcp.pop %v1002
  %v1218 = vmul.f32 %v1002, %v1217
  %v1219 = vsub.f32 1.0, %v1218
  %v1220 = vmul.f32 %v1217, %v1219
  %v1221 = vadd.f32 %v1217, %v1220
  %vm1222 = vweird.f32 %v1002
  %vm1223 = vweird.f32 %v1217
  %vm1224 = vmor %vm1222, %vm1223
  %v1225 = vsel %vm1224, %v1217, %v1221
  %v1226 = vand.u32 2147483647, %v1002
  %vm1227 = vcmp.eq.f32.partialorder %v1226, 8.507059e+37
  %v1228 = vand.u32 %v1002, 2147483648
  %v1229 = vor.u32 1.1754944e-38, %v1228
  %v1230 = vsel %vm1227, %v1229, %v1225
  %v1231 = vmul.f32 %v1110, %v1230
  %v1232 = vrcp.pop %v1003
  %v1233 = vmul.f32 %v1003, %v1232
  %v1234 = vsub.f32 1.0, %v1233
  %v1235 = vmul.f32 %v1232, %v1234
  %v1236 = vadd.f32 %v1232, %v1235
  %vm1237 = vweird.f32 %v1003
  %vm1238 = vweird.f32 %v1232
  %vm1239 = vmor %vm1237, %vm1238
  %v1240 = vsel %vm1239, %v1232, %v1236
  %v1241 = vand.u32 2147483647, %v1003
  %vm1242 = vcmp.eq.f32.partialorder %v1241, 8.507059e+37
  %v1243 = vand.u32 %v1003, 2147483648
  %v1244 = vor.u32 1.1754944e-38, %v1243
  %v1245 = vsel %vm1242, %v1244, %v1240
  %v1246 = vmul.f32 %v1113, %v1245
  %v1247 = vrcp.pop %v1004
  %v1248 = vmul.f32 %v1004, %v1247
  %v1249 = vsub.f32 1.0, %v1248
  %v1250 = vmul.f32 %v1247, %v1249
  %v1251 = vadd.f32 %v1247, %v1250
  %vm1252 = vweird.f32 %v1004
  %vm1253 = vweird.f32 %v1247
  %vm1254 = vmor %vm1252, %vm1253
  %v1255 = vsel %vm1254, %v1247, %v1251
  %v1256 = vand.u32 2147483647, %v1004
  %vm1257 = vcmp.eq.f32.partialorder %v1256, 8.507059e+37
  %v1258 = vand.u32 %v1004, 2147483648
  %v1259 = vor.u32 1.1754944e-38, %v1258
  %v1260 = vsel %vm1257, %v1259, %v1255
  %v1261 = vmul.f32 %v1116, %v1260
  %v1262 = vrcp.pop %v1005
  %v1263 = vmul.f32 %v1005, %v1262
  %v1264 = vsub.f32 1.0, %v1263
  %v1265 = vmul.f32 %v1262, %v1264
  %v1266 = vadd.f32 %v1262, %v1265
  %vm1267 = vweird.f32 %v1005
  %vm1268 = vweird.f32 %v1262
  %vm1269 = vmor %vm1267, %vm1268
  %v1270 = vsel %vm1269, %v1262, %v1266
  %v1271 = vand.u32 2147483647, %v1005
  %vm1272 = vcmp.eq.f32.partialorder %v1271, 8.507059e+37
  %v1273 = vand.u32 %v1005, 2147483648
  %v1274 = vor.u32 1.1754944e-38, %v1273
  %v1275 = vsel %vm1272, %v1274, %v1270
  %v1276 = vmul.f32 %v1119, %v1275
  %v1277 = vrcp.pop %v1006
  %v1278 = vmul.f32 %v1006, %v1277
  %v1279 = vsub.f32 1.0, %v1278
  %v1280 = vmul.f32 %v1277, %v1279
  %v1281 = vadd.f32 %v1277, %v1280
  %vm1282 = vweird.f32 %v1006
  %vm1283 = vweird.f32 %v1277
  %vm1284 = vmor %vm1282, %vm1283
  %v1285 = vsel %vm1284, %v1277, %v1281
  %v1286 = vand.u32 2147483647, %v1006
  %vm1287 = vcmp.eq.f32.partialorder %v1286, 8.507059e+37
  %v1288 = vand.u32 %v1006, 2147483648
  %v1289 = vor.u32 1.1754944e-38, %v1288
  %v1290 = vsel %vm1287, %v1289, %v1285
  %v1291 = vmul.f32 %v1122, %v1290
  %v1292 = vrcp.pop %v1007
  %v1293 = vmul.f32 %v1007, %v1292
  %v1294 = vsub.f32 1.0, %v1293
  %v1295 = vmul.f32 %v1292, %v1294
  %v1296 = vadd.f32 %v1292, %v1295
  %vm1297 = vweird.f32 %v1007
  %vm1298 = vweird.f32 %v1292
  %vm1299 = vmor %vm1297, %vm1298
  %v1300 = vsel %vm1299, %v1292, %v1296
  %v1301 = vand.u32 2147483647, %v1007
  %vm1302 = vcmp.eq.f32.partialorder %v1301, 8.507059e+37
  %v1303 = vand.u32 %v1007, 2147483648
  %v1304 = vor.u32 1.1754944e-38, %v1303
  %v1305 = vsel %vm1302, %v1304, %v1300
  %v1306 = vmul.f32 %v1125, %v1305
  %v1307 = vrcp.pop %v1008
  %v1308 = vmul.f32 %v1008, %v1307
  %v1309 = vsub.f32 1.0, %v1308
  %v1310 = vmul.f32 %v1307, %v1309
  %v1311 = vadd.f32 %v1307, %v1310
  %vm1312 = vweird.f32 %v1008
  %vm1313 = vweird.f32 %v1307
  %vm1314 = vmor %vm1312, %vm1313
  %v1315 = vsel %vm1314, %v1307, %v1311
  %v1316 = vand.u32 2147483647, %v1008
  %vm1317 = vcmp.eq.f32.partialorder %v1316, 8.507059e+37
  %v1318 = vand.u32 %v1008, 2147483648
  %v1319 = vor.u32 1.1754944e-38, %v1318
  %v1320 = vsel %vm1317, %v1319, %v1315
  %v1321 = vmul.f32 %v1128, %v1320
  %v1322 = vrcp.pop %v1009
  %v1323 = vmul.f32 %v1009, %v1322
  %v1324 = vsub.f32 1.0, %v1323
  %v1325 = vmul.f32 %v1322, %v1324
  %v1326 = vadd.f32 %v1322, %v1325
  %vm1327 = vweird.f32 %v1009
  %vm1328 = vweird.f32 %v1322
  %vm1329 = vmor %vm1327, %vm1328
  %v1330 = vsel %vm1329, %v1322, %v1326
  %v1331 = vand.u32 2147483647, %v1009
  %vm1332 = vcmp.eq.f32.partialorder %v1331, 8.507059e+37
  %v1333 = vand.u32 %v1009, 2147483648
  %v1334 = vor.u32 1.1754944e-38, %v1333
  %v1335 = vsel %vm1332, %v1334, %v1330
  %v1336 = vmul.f32 %v1131, %v1335
  %v1337 = vrcp.pop %v1010
  %v1338 = vmul.f32 %v1010, %v1337
  %v1339 = vsub.f32 1.0, %v1338
  %v1340 = vmul.f32 %v1337, %v1339
  %v1341 = vadd.f32 %v1337, %v1340
  %vm1342 = vweird.f32 %v1010
  %vm1343 = vweird.f32 %v1337
  %vm1344 = vmor %vm1342, %vm1343
  %v1345 = vsel %vm1344, %v1337, %v1341
  %v1346 = vand.u32 2147483647, %v1010
  %vm1347 = vcmp.eq.f32.partialorder %v1346, 8.507059e+37
  %v1348 = vand.u32 %v1010, 2147483648
  %v1349 = vor.u32 1.1754944e-38, %v1348
  %v1350 = vsel %vm1347, %v1349, %v1345
  %v1351 = vmul.f32 %v1134, %v1350
  %v1352 = vrcp.pop %v1011
  %v1353 = vmul.f32 %v1011, %v1352
  %v1354 = vsub.f32 1.0, %v1353
  %v1355 = vmul.f32 %v1352, %v1354
  %v1356 = vadd.f32 %v1352, %v1355
  %vm1357 = vweird.f32 %v1011
  %vm1358 = vweird.f32 %v1352
  %vm1359 = vmor %vm1357, %vm1358
  %v1360 = vsel %vm1359, %v1352, %v1356
  %v1361 = vand.u32 2147483647, %v1011
  %vm1362 = vcmp.eq.f32.partialorder %v1361, 8.507059e+37
  %v1363 = vand.u32 %v1011, 2147483648
  %v1364 = vor.u32 1.1754944e-38, %v1363
  %v1365 = vsel %vm1362, %v1364, %v1360
  %v1366 = vmul.f32 %v1137, %v1365
  %v1367 = vrcp.pop %v1012
  %v1368 = vmul.f32 %v1012, %v1367
  %v1369 = vsub.f32 1.0, %v1368
  %v1370 = vmul.f32 %v1367, %v1369
  %v1371 = vadd.f32 %v1367, %v1370
  %vm1372 = vweird.f32 %v1012
  %vm1373 = vweird.f32 %v1367
  %vm1374 = vmor %vm1372, %vm1373
  %v1375 = vsel %vm1374, %v1367, %v1371
  %v1376 = vand.u32 2147483647, %v1012
  %vm1377 = vcmp.eq.f32.partialorder %v1376, 8.507059e+37
  %v1378 = vand.u32 %v1012, 2147483648
  %v1379 = vor.u32 1.1754944e-38, %v1378
  %v1380 = vsel %vm1377, %v1379, %v1375
  %v1381 = vmul.f32 %v1140, %v1380
  %1382 = vset.pattern.permute.xlu0 2
  %1383 = vperm.xlu0 %1382, %v34
  %v1384 = vpop.permute.xlu0 %1383
  %1386 = vset.pattern.permute.xlu0 2
  %1387 = vperm.xlu0 %1386, %v35
  %v1388 = vpop.permute.xlu0 %1387
  %1390 = vset.pattern.permute.xlu0 2
  %1391 = vperm.xlu0 %1390, %v36
  %v1392 = vpop.permute.xlu0 %1391
  %1394 = vset.pattern.permute.xlu0 2
  %1395 = vperm.xlu0 %1394, %v37
  %v1396 = vpop.permute.xlu0 %1395
  %1398 = vset.pattern.permute.xlu0 2
  %1399 = vperm.xlu0 %1398, %v38
  %v1400 = vpop.permute.xlu0 %1399
  %1402 = vset.pattern.permute.xlu0 2
  %1403 = vperm.xlu0 %1402, %v39
  %v1404 = vpop.permute.xlu0 %1403
  %1406 = vset.pattern.permute.xlu0 2
  %1407 = vperm.xlu0 %1406, %v40
  %v1408 = vpop.permute.xlu0 %1407
  %1410 = vset.pattern.permute.xlu0 2
  %1411 = vperm.xlu0 %1410, %v41
  %v1412 = vpop.permute.xlu0 %1411
  %1414 = vset.pattern.permute.xlu0 2
  %1415 = vperm.xlu0 %1414, %v42
  %v1416 = vpop.permute.xlu0 %1415
  %1418 = vset.pattern.permute.xlu0 2
  %1419 = vperm.xlu0 %1418, %v43
  %v1420 = vpop.permute.xlu0 %1419
  %1422 = vset.pattern.permute.xlu0 2
  %1423 = vperm.xlu0 %1422, %v44
  %v1424 = vpop.permute.xlu0 %1423
  %1426 = vset.pattern.permute.xlu0 2
  %1427 = vperm.xlu0 %1426, %v45
  %v1428 = vpop.permute.xlu0 %1427
  %1430 = vset.pattern.permute.xlu0 2
  %1431 = vperm.xlu0 %1430, %v46
  %v1432 = vpop.permute.xlu0 %1431
  %1434 = vset.pattern.permute.xlu0 2
  %1435 = vperm.xlu0 %1434, %v47
  %v1436 = vpop.permute.xlu0 %1435
  %1438 = vset.pattern.permute.xlu0 2
  %1439 = vperm.xlu0 %1438, %v48
  %v1440 = vpop.permute.xlu0 %1439
  %1442 = vset.pattern.permute.xlu0 2
  %1443 = vperm.xlu0 %1442, %v49
  %v1444 = vpop.permute.xlu0 %1443
  %v1446 = vperm.slane %v33, 2
  %v1447 = vadd.f32 %v1384, %v1446
  %v1448 = vadd.f32 %v1388, %v1446
  %v1449 = vadd.f32 %v1392, %v1446
  %v1450 = vadd.f32 %v1396, %v1446
  %v1451 = vadd.f32 %v1400, %v1446
  %v1452 = vadd.f32 %v1404, %v1446
  %v1453 = vadd.f32 %v1408, %v1446
  %v1454 = vadd.f32 %v1412, %v1446
  %v1455 = vadd.f32 %v1416, %v1446
  %v1456 = vadd.f32 %v1420, %v1446
  %v1457 = vadd.f32 %v1424, %v1446
  %v1458 = vadd.f32 %v1428, %v1446
  %v1459 = vadd.f32 %v1432, %v1446
  %v1460 = vadd.f32 %v1436, %v1446
  %v1461 = vadd.f32 %v1440, %v1446
  %v1462 = vadd.f32 %v1444, %v1446
  %v1463 = vmul.f32 %v1447, 0.01
  %v1464 = vmul.f32 %v1448, 0.01
  %v1465 = vmul.f32 %v1449, 0.01
  %v1466 = vmul.f32 %v1450, 0.01
  %v1467 = vmul.f32 %v1451, 0.01
  %v1468 = vmul.f32 %v1452, 0.01
  %v1469 = vmul.f32 %v1453, 0.01
  %v1470 = vmul.f32 %v1454, 0.01
  %v1471 = vmul.f32 %v1455, 0.01
  %v1472 = vmul.f32 %v1456, 0.01
  %v1473 = vmul.f32 %v1457, 0.01
  %v1474 = vmul.f32 %v1458, 0.01
  %v1475 = vmul.f32 %v1459, 0.01
  %v1476 = vmul.f32 %v1460, 0.01
  %v1477 = vmul.f32 %v1461, 0.01
  %v1478 = vmul.f32 %v1462, 0.01
  %v1479 = vmax.f32 %v1447, %v1463
  %v1480 = vmax.f32 %v1448, %v1464
  %v1481 = vmax.f32 %v1449, %v1465
  %v1482 = vmax.f32 %v1450, %v1466
  %v1483 = vmax.f32 %v1451, %v1467
  %v1484 = vmax.f32 %v1452, %v1468
  %v1485 = vmax.f32 %v1453, %v1469
  %v1486 = vmax.f32 %v1454, %v1470
  %v1487 = vmax.f32 %v1455, %v1471
  %v1488 = vmax.f32 %v1456, %v1472
  %v1489 = vmax.f32 %v1457, %v1473
  %v1490 = vmax.f32 %v1458, %v1474
  %v1491 = vmax.f32 %v1459, %v1475
  %v1492 = vmax.f32 %v1460, %v1476
  %v1493 = vmax.f32 %v1461, %v1477
  %v1494 = vmax.f32 %v1462, %v1478
  %v1495 = vadd.f32 %v1479, %v66
  %v1496 = vadd.f32 %v1480, %v67
  %v1497 = vadd.f32 %v1481, %v68
  %v1498 = vadd.f32 %v1482, %v69
  %v1499 = vadd.f32 %v1483, %v70
  %v1500 = vadd.f32 %v1484, %v71
  %v1501 = vadd.f32 %v1485, %v72
  %v1502 = vadd.f32 %v1486, %v73
  %v1503 = vadd.f32 %v1487, %v74
  %v1504 = vadd.f32 %v1488, %v75
  %v1505 = vadd.f32 %v1489, %v76
  %v1506 = vadd.f32 %v1490, %v77
  %v1507 = vadd.f32 %v1491, %v78
  %v1508 = vadd.f32 %v1492, %v79
  %v1509 = vadd.f32 %v1493, %v80
  %v1510 = vadd.f32 %v1494, %v81
  %1511 = vmax.xlane.f32.xlu0 %v1495
  %v1512 = vpop.xlane.xlu0 %1511
  %1513 = vmax.xlane.f32.xlu0 %v1496
  %v1514 = vpop.xlane.xlu0 %1513
  %1515 = vmax.xlane.f32.xlu0 %v1497
  %v1516 = vpop.xlane.xlu0 %1515
  %1517 = vmax.xlane.f32.xlu0 %v1498
  %v1518 = vpop.xlane.xlu0 %1517
  %1519 = vmax.xlane.f32.xlu0 %v1499
  %v1520 = vpop.xlane.xlu0 %1519
  %1521 = vmax.xlane.f32.xlu0 %v1500
  %v1522 = vpop.xlane.xlu0 %1521
  %1523 = vmax.xlane.f32.xlu0 %v1501
  %v1524 = vpop.xlane.xlu0 %1523
  %1525 = vmax.xlane.f32.xlu0 %v1502
  %v1526 = vpop.xlane.xlu0 %1525
  %1527 = vmax.xlane.f32.xlu0 %v1503
  %v1528 = vpop.xlane.xlu0 %1527
  %1529 = vmax.xlane.f32.xlu0 %v1504
  %v1530 = vpop.xlane.xlu0 %1529
  %1531 = vmax.xlane.f32.xlu0 %v1505
  %v1532 = vpop.xlane.xlu0 %1531
  %1533 = vmax.xlane.f32.xlu0 %v1506
  %v1534 = vpop.xlane.xlu0 %1533
  %1535 = vmax.xlane.f32.xlu0 %v1507
  %v1536 = vpop.xlane.xlu0 %1535
  %1537 = vmax.xlane.f32.xlu0 %v1508
  %v1538 = vpop.xlane.xlu0 %1537
  %1539 = vmax.xlane.f32.xlu0 %v1509
  %v1540 = vpop.xlane.xlu0 %1539
  %1541 = vmax.xlane.f32.xlu0 %v1510
  %v1542 = vpop.xlane.xlu0 %1541
  %vm1543 = vcmp.gt.f32.partialorder %v1512, -inf
  %vm1544 = vcmp.gt.f32.partialorder %v1514, -inf
  %vm1545 = vcmp.gt.f32.partialorder %v1516, -inf
  %vm1546 = vcmp.gt.f32.partialorder %v1518, -inf
  %vm1547 = vcmp.gt.f32.partialorder %v1520, -inf
  %vm1548 = vcmp.gt.f32.partialorder %v1522, -inf
  %vm1549 = vcmp.gt.f32.partialorder %v1524, -inf
  %vm1550 = vcmp.gt.f32.partialorder %v1526, -inf
  %vm1551 = vcmp.gt.f32.partialorder %v1528, -inf
  %vm1552 = vcmp.gt.f32.partialorder %v1530, -inf
  %vm1553 = vcmp.gt.f32.partialorder %v1532, -inf
  %vm1554 = vcmp.gt.f32.partialorder %v1534, -inf
  %vm1555 = vcmp.gt.f32.partialorder %v1536, -inf
  %vm1556 = vcmp.gt.f32.partialorder %v1538, -inf
  %vm1557 = vcmp.gt.f32.partialorder %v1540, -inf
  %vm1558 = vcmp.gt.f32.partialorder %v1542, -inf
  %v1559 = vsel %vm1543, %v1512, 0.0
  %v1560 = vsel %vm1544, %v1514, 0.0
  %v1561 = vsel %vm1545, %v1516, 0.0
  %v1562 = vsel %vm1546, %v1518, 0.0
  %v1563 = vsel %vm1547, %v1520, 0.0
  %v1564 = vsel %vm1548, %v1522, 0.0
  %v1565 = vsel %vm1549, %v1524, 0.0
  %v1566 = vsel %vm1550, %v1526, 0.0
  %v1567 = vsel %vm1551, %v1528, 0.0
  %v1568 = vsel %vm1552, %v1530, 0.0
  %v1569 = vsel %vm1553, %v1532, 0.0
  %v1570 = vsel %vm1554, %v1534, 0.0
  %v1571 = vsel %vm1555, %v1536, 0.0
  %v1572 = vsel %vm1556, %v1538, 0.0
  %v1573 = vsel %vm1557, %v1540, 0.0
  %v1574 = vsel %vm1558, %v1542, 0.0
  %v1575 = vsub.f32 %v1495, %v1559
  %v1576 = vsub.f32 %v1496, %v1560
  %v1577 = vsub.f32 %v1497, %v1561
  %v1578 = vsub.f32 %v1498, %v1562
  %v1579 = vsub.f32 %v1499, %v1563
  %v1580 = vsub.f32 %v1500, %v1564
  %v1581 = vsub.f32 %v1501, %v1565
  %v1582 = vsub.f32 %v1502, %v1566
  %v1583 = vsub.f32 %v1503, %v1567
  %v1584 = vsub.f32 %v1504, %v1568
  %v1585 = vsub.f32 %v1505, %v1569
  %v1586 = vsub.f32 %v1506, %v1570
  %v1587 = vsub.f32 %v1507, %v1571
  %v1588 = vsub.f32 %v1508, %v1572
  %v1589 = vsub.f32 %v1509, %v1573
  %v1590 = vsub.f32 %v1510, %v1574
  %v1591 = vmul.f32 %v1575, 1.442695
  %v1592 = vpow.pop %v1591
  %v1593 = vmul.f32 %v1576, 1.442695
  %v1594 = vpow.pop %v1593
  %v1595 = vmul.f32 %v1577, 1.442695
  %v1596 = vpow.pop %v1595
  %v1597 = vmul.f32 %v1578, 1.442695
  %v1598 = vpow.pop %v1597
  %v1599 = vmul.f32 %v1579, 1.442695
  %v1600 = vpow.pop %v1599
  %v1601 = vmul.f32 %v1580, 1.442695
  %v1602 = vpow.pop %v1601
  %v1603 = vmul.f32 %v1581, 1.442695
  %v1604 = vpow.pop %v1603
  %v1605 = vmul.f32 %v1582, 1.442695
  %v1606 = vpow.pop %v1605
  %v1607 = vmul.f32 %v1583, 1.442695
  %v1608 = vpow.pop %v1607
  %v1609 = vmul.f32 %v1584, 1.442695
  %v1610 = vpow.pop %v1609
  %v1611 = vmul.f32 %v1585, 1.442695
  %v1612 = vpow.pop %v1611
  %v1613 = vmul.f32 %v1586, 1.442695
  %v1614 = vpow.pop %v1613
  %v1615 = vmul.f32 %v1587, 1.442695
  %v1616 = vpow.pop %v1615
  %v1617 = vmul.f32 %v1588, 1.442695
  %v1618 = vpow.pop %v1617
  %v1619 = vmul.f32 %v1589, 1.442695
  %v1620 = vpow.pop %v1619
  %v1621 = vmul.f32 %v1590, 1.442695
  %v1622 = vpow.pop %v1621
  %1623 = vadd.xlane.f32.xlu0 %v1592
  %v1624 = vpop.xlane.xlu0 %1623
  %1625 = vadd.xlane.f32.xlu0 %v1594
  %v1626 = vpop.xlane.xlu0 %1625
  %1627 = vadd.xlane.f32.xlu0 %v1596
  %v1628 = vpop.xlane.xlu0 %1627
  %1629 = vadd.xlane.f32.xlu0 %v1598
  %v1630 = vpop.xlane.xlu0 %1629
  %1631 = vadd.xlane.f32.xlu0 %v1600
  %v1632 = vpop.xlane.xlu0 %1631
  %1633 = vadd.xlane.f32.xlu0 %v1602
  %v1634 = vpop.xlane.xlu0 %1633
  %1635 = vadd.xlane.f32.xlu0 %v1604
  %v1636 = vpop.xlane.xlu0 %1635
  %1637 = vadd.xlane.f32.xlu0 %v1606
  %v1638 = vpop.xlane.xlu0 %1637
  %1639 = vadd.xlane.f32.xlu0 %v1608
  %v1640 = vpop.xlane.xlu0 %1639
  %1641 = vadd.xlane.f32.xlu0 %v1610
  %v1642 = vpop.xlane.xlu0 %1641
  %1643 = vadd.xlane.f32.xlu0 %v1612
  %v1644 = vpop.xlane.xlu0 %1643
  %1645 = vadd.xlane.f32.xlu0 %v1614
  %v1646 = vpop.xlane.xlu0 %1645
  %1647 = vadd.xlane.f32.xlu0 %v1616
  %v1648 = vpop.xlane.xlu0 %1647
  %1649 = vadd.xlane.f32.xlu0 %v1618
  %v1650 = vpop.xlane.xlu0 %1649
  %1651 = vadd.xlane.f32.xlu0 %v1620
  %v1652 = vpop.xlane.xlu0 %1651
  %1653 = vadd.xlane.f32.xlu0 %v1622
  %v1654 = vpop.xlane.xlu0 %1653
  %vm1655 = vcmp.gt.f32.partialorder %v1624, 0.0
  %vm1656 = vcmp.gt.f32.partialorder %v1626, 0.0
  %vm1657 = vcmp.gt.f32.partialorder %v1628, 0.0
  %vm1658 = vcmp.gt.f32.partialorder %v1630, 0.0
  %vm1659 = vcmp.gt.f32.partialorder %v1632, 0.0
  %vm1660 = vcmp.gt.f32.partialorder %v1634, 0.0
  %vm1661 = vcmp.gt.f32.partialorder %v1636, 0.0
  %vm1662 = vcmp.gt.f32.partialorder %v1638, 0.0
  %vm1663 = vcmp.gt.f32.partialorder %v1640, 0.0
  %vm1664 = vcmp.gt.f32.partialorder %v1642, 0.0
  %vm1665 = vcmp.gt.f32.partialorder %v1644, 0.0
  %vm1666 = vcmp.gt.f32.partialorder %v1646, 0.0
  %vm1667 = vcmp.gt.f32.partialorder %v1648, 0.0
  %vm1668 = vcmp.gt.f32.partialorder %v1650, 0.0
  %vm1669 = vcmp.gt.f32.partialorder %v1652, 0.0
  %vm1670 = vcmp.gt.f32.partialorder %v1654, 0.0
  %v1671 = vsel %vm1655, %v1624, 1.0
  %v1672 = vsel %vm1656, %v1626, 1.0
  %v1673 = vsel %vm1657, %v1628, 1.0
  %v1674 = vsel %vm1658, %v1630, 1.0
  %v1675 = vsel %vm1659, %v1632, 1.0
  %v1676 = vsel %vm1660, %v1634, 1.0
  %v1677 = vsel %vm1661, %v1636, 1.0
  %v1678 = vsel %vm1662, %v1638, 1.0
  %v1679 = vsel %vm1663, %v1640, 1.0
  %v1680 = vsel %vm1664, %v1642, 1.0
  %v1681 = vsel %vm1665, %v1644, 1.0
  %v1682 = vsel %vm1666, %v1646, 1.0
  %v1683 = vsel %vm1667, %v1648, 1.0
  %v1684 = vsel %vm1668, %v1650, 1.0
  %v1685 = vsel %vm1669, %v1652, 1.0
  %v1686 = vsel %vm1670, %v1654, 1.0
  %1687 = vrot.lane.b32.xlu0 %v17, 96
  %v1688 = vpop.permute.xlu0 %1687
  %1689 = vrot.lane.b32.xlu0 %v18, 96
  %v1690 = vpop.permute.xlu0 %1689
  %1691 = vrot.lane.b32.xlu0 %v19, 96
  %v1692 = vpop.permute.xlu0 %1691
  %1693 = vrot.lane.b32.xlu0 %v20, 96
  %v1694 = vpop.permute.xlu0 %1693
  %1695 = vrot.lane.b32.xlu0 %v21, 96
  %v1696 = vpop.permute.xlu0 %1695
  %1697 = vrot.lane.b32.xlu0 %v22, 96
  %v1698 = vpop.permute.xlu0 %1697
  %1699 = vrot.lane.b32.xlu0 %v23, 96
  %v1700 = vpop.permute.xlu0 %1699
  %1701 = vrot.lane.b32.xlu0 %v24, 96
  %v1702 = vpop.permute.xlu0 %1701
  %1703 = vrot.lane.b32.xlu0 %v25, 96
  %v1704 = vpop.permute.xlu0 %1703
  %1705 = vrot.lane.b32.xlu0 %v26, 96
  %v1706 = vpop.permute.xlu0 %1705
  %1707 = vrot.lane.b32.xlu0 %v27, 96
  %v1708 = vpop.permute.xlu0 %1707
  %1709 = vrot.lane.b32.xlu0 %v28, 96
  %v1710 = vpop.permute.xlu0 %1709
  %1711 = vrot.lane.b32.xlu0 %v29, 96
  %v1712 = vpop.permute.xlu0 %1711
  %1713 = vrot.lane.b32.xlu0 %v30, 96
  %v1714 = vpop.permute.xlu0 %1713
  %1715 = vrot.lane.b32.xlu0 %v31, 96
  %v1716 = vpop.permute.xlu0 %1715
  %1717 = vrot.lane.b32.xlu0 %v32, 96
  %v1718 = vpop.permute.xlu0 %1717
  %1735 = vmatpush.msra.mxu0 %v1718
  %1736 = vmatpush.msra.mxu0 %v1716
  %1737 = vmatpush.msra.mxu0 %v1714
  %1738 = vmatpush.msra.mxu0 %v1712
  %1739 = vmatpush.msra.mxu0 %v1710
  %1740 = vmatpush.msra.mxu0 %v1708
  %1741 = vmatpush.msra.mxu0 %v1706
  %1742 = vmatpush.msra.mxu0 %v1704
  %1743 = vmatpush.msra.mxu0 %v1702
  %1744 = vmatpush.msra.mxu0 %v1700
  %1745 = vmatpush.msra.mxu0 %v1698
  %1746 = vmatpush.msra.mxu0 %v1696
  %1747 = vmatpush.msra.mxu0 %v1694
  %1748 = vmatpush.msra.mxu0 %v1692
  %1749 = vmatpush.msra.mxu0 %v1690
  %1750 = vmatpush.msra.mxu0 %v1688
  %1751 = vmatmul.f32.gmra.mxu0 %v1592
  %v1752 = vpop.f32.mrf.mxu0
  %v1753 = vadd.f32 0.0, %v1752
  %1754 = vmatmul.f32.gmra.mxu0 %v1594
  %v1755 = vpop.f32.mrf.mxu0
  %v1756 = vadd.f32 0.0, %v1755
  %1757 = vmatmul.f32.gmra.mxu0 %v1596
  %v1758 = vpop.f32.mrf.mxu0
  %v1759 = vadd.f32 0.0, %v1758
  %1760 = vmatmul.f32.gmra.mxu0 %v1598
  %v1761 = vpop.f32.mrf.mxu0
  %v1762 = vadd.f32 0.0, %v1761
  %1763 = vmatmul.f32.gmra.mxu0 %v1600
  %v1764 = vpop.f32.mrf.mxu0
  %v1765 = vadd.f32 0.0, %v1764
  %1766 = vmatmul.f32.gmra.mxu0 %v1602
  %v1767 = vpop.f32.mrf.mxu0
  %v1768 = vadd.f32 0.0, %v1767
  %1769 = vmatmul.f32.gmra.mxu0 %v1604
  %v1770 = vpop.f32.mrf.mxu0
  %v1771 = vadd.f32 0.0, %v1770
  %1772 = vmatmul.f32.gmra.mxu0 %v1606
  %v1773 = vpop.f32.mrf.mxu0
  %v1774 = vadd.f32 0.0, %v1773
  %1775 = vmatmul.f32.gmra.mxu0 %v1608
  %v1776 = vpop.f32.mrf.mxu0
  %v1777 = vadd.f32 0.0, %v1776
  %1778 = vmatmul.f32.gmra.mxu0 %v1610
  %v1779 = vpop.f32.mrf.mxu0
  %v1780 = vadd.f32 0.0, %v1779
  %1781 = vmatmul.f32.gmra.mxu0 %v1612
  %v1782 = vpop.f32.mrf.mxu0
  %v1783 = vadd.f32 0.0, %v1782
  %1784 = vmatmul.f32.gmra.mxu0 %v1614
  %v1785 = vpop.f32.mrf.mxu0
  %v1786 = vadd.f32 0.0, %v1785
  %1787 = vmatmul.f32.gmra.mxu0 %v1616
  %v1788 = vpop.f32.mrf.mxu0
  %v1789 = vadd.f32 0.0, %v1788
  %1790 = vmatmul.f32.gmra.mxu0 %v1618
  %v1791 = vpop.f32.mrf.mxu0
  %v1792 = vadd.f32 0.0, %v1791
  %1793 = vmatmul.f32.gmra.mxu0 %v1620
  %v1794 = vpop.f32.mrf.mxu0
  %v1795 = vadd.f32 0.0, %v1794
  %1796 = vmatmul.f32.gmra.mxu0 %v1622
  %v1797 = vpop.f32.mrf.mxu0
  %v1798 = vadd.f32 0.0, %v1797
  %1799 = vdwg.mxu0
  %v1800 = vrcp.pop %v1671
  %v1801 = vmul.f32 %v1671, %v1800
  %v1802 = vsub.f32 1.0, %v1801
  %v1803 = vmul.f32 %v1800, %v1802
  %v1804 = vadd.f32 %v1800, %v1803
  %vm1805 = vweird.f32 %v1671
  %vm1806 = vweird.f32 %v1800
  %vm1807 = vmor %vm1805, %vm1806
  %v1808 = vsel %vm1807, %v1800, %v1804
  %v1809 = vand.u32 2147483647, %v1671
  %vm1810 = vcmp.eq.f32.partialorder %v1809, 8.507059e+37
  %v1811 = vand.u32 %v1671, 2147483648
  %v1812 = vor.u32 1.1754944e-38, %v1811
  %v1813 = vsel %vm1810, %v1812, %v1808
  %v1814 = vmul.f32 %v1753, %v1813
  %v1815 = vrcp.pop %v1672
  %v1816 = vmul.f32 %v1672, %v1815
  %v1817 = vsub.f32 1.0, %v1816
  %v1818 = vmul.f32 %v1815, %v1817
  %v1819 = vadd.f32 %v1815, %v1818
  %vm1820 = vweird.f32 %v1672
  %vm1821 = vweird.f32 %v1815
  %vm1822 = vmor %vm1820, %vm1821
  %v1823 = vsel %vm1822, %v1815, %v1819
  %v1824 = vand.u32 2147483647, %v1672
  %vm1825 = vcmp.eq.f32.partialorder %v1824, 8.507059e+37
  %v1826 = vand.u32 %v1672, 2147483648
  %v1827 = vor.u32 1.1754944e-38, %v1826
  %v1828 = vsel %vm1825, %v1827, %v1823
  %v1829 = vmul.f32 %v1756, %v1828
  %v1830 = vrcp.pop %v1673
  %v1831 = vmul.f32 %v1673, %v1830
  %v1832 = vsub.f32 1.0, %v1831
  %v1833 = vmul.f32 %v1830, %v1832
  %v1834 = vadd.f32 %v1830, %v1833
  %vm1835 = vweird.f32 %v1673
  %vm1836 = vweird.f32 %v1830
  %vm1837 = vmor %vm1835, %vm1836
  %v1838 = vsel %vm1837, %v1830, %v1834
  %v1839 = vand.u32 2147483647, %v1673
  %vm1840 = vcmp.eq.f32.partialorder %v1839, 8.507059e+37
  %v1841 = vand.u32 %v1673, 2147483648
  %v1842 = vor.u32 1.1754944e-38, %v1841
  %v1843 = vsel %vm1840, %v1842, %v1838
  %v1844 = vmul.f32 %v1759, %v1843
  %v1845 = vrcp.pop %v1674
  %v1846 = vmul.f32 %v1674, %v1845
  %v1847 = vsub.f32 1.0, %v1846
  %v1848 = vmul.f32 %v1845, %v1847
  %v1849 = vadd.f32 %v1845, %v1848
  %vm1850 = vweird.f32 %v1674
  %vm1851 = vweird.f32 %v1845
  %vm1852 = vmor %vm1850, %vm1851
  %v1853 = vsel %vm1852, %v1845, %v1849
  %v1854 = vand.u32 2147483647, %v1674
  %vm1855 = vcmp.eq.f32.partialorder %v1854, 8.507059e+37
  %v1856 = vand.u32 %v1674, 2147483648
  %v1857 = vor.u32 1.1754944e-38, %v1856
  %v1858 = vsel %vm1855, %v1857, %v1853
  %v1859 = vmul.f32 %v1762, %v1858
  %v1860 = vrcp.pop %v1675
  %v1861 = vmul.f32 %v1675, %v1860
  %v1862 = vsub.f32 1.0, %v1861
  %v1863 = vmul.f32 %v1860, %v1862
  %v1864 = vadd.f32 %v1860, %v1863
  %vm1865 = vweird.f32 %v1675
  %vm1866 = vweird.f32 %v1860
  %vm1867 = vmor %vm1865, %vm1866
  %v1868 = vsel %vm1867, %v1860, %v1864
  %v1869 = vand.u32 2147483647, %v1675
  %vm1870 = vcmp.eq.f32.partialorder %v1869, 8.507059e+37
  %v1871 = vand.u32 %v1675, 2147483648
  %v1872 = vor.u32 1.1754944e-38, %v1871
  %v1873 = vsel %vm1870, %v1872, %v1868
  %v1874 = vmul.f32 %v1765, %v1873
  %v1875 = vrcp.pop %v1676
  %v1876 = vmul.f32 %v1676, %v1875
  %v1877 = vsub.f32 1.0, %v1876
  %v1878 = vmul.f32 %v1875, %v1877
  %v1879 = vadd.f32 %v1875, %v1878
  %vm1880 = vweird.f32 %v1676
  %vm1881 = vweird.f32 %v1875
  %vm1882 = vmor %vm1880, %vm1881
  %v1883 = vsel %vm1882, %v1875, %v1879
  %v1884 = vand.u32 2147483647, %v1676
  %vm1885 = vcmp.eq.f32.partialorder %v1884, 8.507059e+37
  %v1886 = vand.u32 %v1676, 2147483648
  %v1887 = vor.u32 1.1754944e-38, %v1886
  %v1888 = vsel %vm1885, %v1887, %v1883
  %v1889 = vmul.f32 %v1768, %v1888
  %v1890 = vrcp.pop %v1677
  %v1891 = vmul.f32 %v1677, %v1890
  %v1892 = vsub.f32 1.0, %v1891
  %v1893 = vmul.f32 %v1890, %v1892
  %v1894 = vadd.f32 %v1890, %v1893
  %vm1895 = vweird.f32 %v1677
  %vm1896 = vweird.f32 %v1890
  %vm1897 = vmor %vm1895, %vm1896
  %v1898 = vsel %vm1897, %v1890, %v1894
  %v1899 = vand.u32 2147483647, %v1677
  %vm1900 = vcmp.eq.f32.partialorder %v1899, 8.507059e+37
  %v1901 = vand.u32 %v1677, 2147483648
  %v1902 = vor.u32 1.1754944e-38, %v1901
  %v1903 = vsel %vm1900, %v1902, %v1898
  %v1904 = vmul.f32 %v1771, %v1903
  %v1905 = vrcp.pop %v1678
  %v1906 = vmul.f32 %v1678, %v1905
  %v1907 = vsub.f32 1.0, %v1906
  %v1908 = vmul.f32 %v1905, %v1907
  %v1909 = vadd.f32 %v1905, %v1908
  %vm1910 = vweird.f32 %v1678
  %vm1911 = vweird.f32 %v1905
  %vm1912 = vmor %vm1910, %vm1911
  %v1913 = vsel %vm1912, %v1905, %v1909
  %v1914 = vand.u32 2147483647, %v1678
  %vm1915 = vcmp.eq.f32.partialorder %v1914, 8.507059e+37
  %v1916 = vand.u32 %v1678, 2147483648
  %v1917 = vor.u32 1.1754944e-38, %v1916
  %v1918 = vsel %vm1915, %v1917, %v1913
  %v1919 = vmul.f32 %v1774, %v1918
  %v1920 = vrcp.pop %v1679
  %v1921 = vmul.f32 %v1679, %v1920
  %v1922 = vsub.f32 1.0, %v1921
  %v1923 = vmul.f32 %v1920, %v1922
  %v1924 = vadd.f32 %v1920, %v1923
  %vm1925 = vweird.f32 %v1679
  %vm1926 = vweird.f32 %v1920
  %vm1927 = vmor %vm1925, %vm1926
  %v1928 = vsel %vm1927, %v1920, %v1924
  %v1929 = vand.u32 2147483647, %v1679
  %vm1930 = vcmp.eq.f32.partialorder %v1929, 8.507059e+37
  %v1931 = vand.u32 %v1679, 2147483648
  %v1932 = vor.u32 1.1754944e-38, %v1931
  %v1933 = vsel %vm1930, %v1932, %v1928
  %v1934 = vmul.f32 %v1777, %v1933
  %v1935 = vrcp.pop %v1680
  %v1936 = vmul.f32 %v1680, %v1935
  %v1937 = vsub.f32 1.0, %v1936
  %v1938 = vmul.f32 %v1935, %v1937
  %v1939 = vadd.f32 %v1935, %v1938
  %vm1940 = vweird.f32 %v1680
  %vm1941 = vweird.f32 %v1935
  %vm1942 = vmor %vm1940, %vm1941
  %v1943 = vsel %vm1942, %v1935, %v1939
  %v1944 = vand.u32 2147483647, %v1680
  %vm1945 = vcmp.eq.f32.partialorder %v1944, 8.507059e+37
  %v1946 = vand.u32 %v1680, 2147483648
  %v1947 = vor.u32 1.1754944e-38, %v1946
  %v1948 = vsel %vm1945, %v1947, %v1943
  %v1949 = vmul.f32 %v1780, %v1948
  %v1950 = vrcp.pop %v1681
  %v1951 = vmul.f32 %v1681, %v1950
  %v1952 = vsub.f32 1.0, %v1951
  %v1953 = vmul.f32 %v1950, %v1952
  %v1954 = vadd.f32 %v1950, %v1953
  %vm1955 = vweird.f32 %v1681
  %vm1956 = vweird.f32 %v1950
  %vm1957 = vmor %vm1955, %vm1956
  %v1958 = vsel %vm1957, %v1950, %v1954
  %v1959 = vand.u32 2147483647, %v1681
  %vm1960 = vcmp.eq.f32.partialorder %v1959, 8.507059e+37
  %v1961 = vand.u32 %v1681, 2147483648
  %v1962 = vor.u32 1.1754944e-38, %v1961
  %v1963 = vsel %vm1960, %v1962, %v1958
  %v1964 = vmul.f32 %v1783, %v1963
  %v1965 = vrcp.pop %v1682
  %v1966 = vmul.f32 %v1682, %v1965
  %v1967 = vsub.f32 1.0, %v1966
  %v1968 = vmul.f32 %v1965, %v1967
  %v1969 = vadd.f32 %v1965, %v1968
  %vm1970 = vweird.f32 %v1682
  %vm1971 = vweird.f32 %v1965
  %vm1972 = vmor %vm1970, %vm1971
  %v1973 = vsel %vm1972, %v1965, %v1969
  %v1974 = vand.u32 2147483647, %v1682
  %vm1975 = vcmp.eq.f32.partialorder %v1974, 8.507059e+37
  %v1976 = vand.u32 %v1682, 2147483648
  %v1977 = vor.u32 1.1754944e-38, %v1976
  %v1978 = vsel %vm1975, %v1977, %v1973
  %v1979 = vmul.f32 %v1786, %v1978
  %v1980 = vrcp.pop %v1683
  %v1981 = vmul.f32 %v1683, %v1980
  %v1982 = vsub.f32 1.0, %v1981
  %v1983 = vmul.f32 %v1980, %v1982
  %v1984 = vadd.f32 %v1980, %v1983
  %vm1985 = vweird.f32 %v1683
  %vm1986 = vweird.f32 %v1980
  %vm1987 = vmor %vm1985, %vm1986
  %v1988 = vsel %vm1987, %v1980, %v1984
  %v1989 = vand.u32 2147483647, %v1683
  %vm1990 = vcmp.eq.f32.partialorder %v1989, 8.507059e+37
  %v1991 = vand.u32 %v1683, 2147483648
  %v1992 = vor.u32 1.1754944e-38, %v1991
  %v1993 = vsel %vm1990, %v1992, %v1988
  %v1994 = vmul.f32 %v1789, %v1993
  %v1995 = vrcp.pop %v1684
  %v1996 = vmul.f32 %v1684, %v1995
  %v1997 = vsub.f32 1.0, %v1996
  %v1998 = vmul.f32 %v1995, %v1997
  %v1999 = vadd.f32 %v1995, %v1998
  %vm2000 = vweird.f32 %v1684
  %vm2001 = vweird.f32 %v1995
  %vm2002 = vmor %vm2000, %vm2001
  %v2003 = vsel %vm2002, %v1995, %v1999
  %v2004 = vand.u32 2147483647, %v1684
  %vm2005 = vcmp.eq.f32.partialorder %v2004, 8.507059e+37
  %v2006 = vand.u32 %v1684, 2147483648
  %v2007 = vor.u32 1.1754944e-38, %v2006
  %v2008 = vsel %vm2005, %v2007, %v2003
  %v2009 = vmul.f32 %v1792, %v2008
  %v2010 = vrcp.pop %v1685
  %v2011 = vmul.f32 %v1685, %v2010
  %v2012 = vsub.f32 1.0, %v2011
  %v2013 = vmul.f32 %v2010, %v2012
  %v2014 = vadd.f32 %v2010, %v2013
  %vm2015 = vweird.f32 %v1685
  %vm2016 = vweird.f32 %v2010
  %vm2017 = vmor %vm2015, %vm2016
  %v2018 = vsel %vm2017, %v2010, %v2014
  %v2019 = vand.u32 2147483647, %v1685
  %vm2020 = vcmp.eq.f32.partialorder %v2019, 8.507059e+37
  %v2021 = vand.u32 %v1685, 2147483648
  %v2022 = vor.u32 1.1754944e-38, %v2021
  %v2023 = vsel %vm2020, %v2022, %v2018
  %v2024 = vmul.f32 %v1795, %v2023
  %v2025 = vrcp.pop %v1686
  %v2026 = vmul.f32 %v1686, %v2025
  %v2027 = vsub.f32 1.0, %v2026
  %v2028 = vmul.f32 %v2025, %v2027
  %v2029 = vadd.f32 %v2025, %v2028
  %vm2030 = vweird.f32 %v1686
  %vm2031 = vweird.f32 %v2025
  %vm2032 = vmor %vm2030, %vm2031
  %v2033 = vsel %vm2032, %v2025, %v2029
  %v2034 = vand.u32 2147483647, %v1686
  %vm2035 = vcmp.eq.f32.partialorder %v2034, 8.507059e+37
  %v2036 = vand.u32 %v1686, 2147483648
  %v2037 = vor.u32 1.1754944e-38, %v2036
  %v2038 = vsel %vm2035, %v2037, %v2033
  %v2039 = vmul.f32 %v1798, %v2038
  %2040 = vset.pattern.permute.xlu0 3
  %2041 = vperm.xlu0 %2040, %v34
  %v2042 = vpop.permute.xlu0 %2041
  %2044 = vset.pattern.permute.xlu0 3
  %2045 = vperm.xlu0 %2044, %v35
  %v2046 = vpop.permute.xlu0 %2045
  %2048 = vset.pattern.permute.xlu0 3
  %2049 = vperm.xlu0 %2048, %v36
  %v2050 = vpop.permute.xlu0 %2049
  %2052 = vset.pattern.permute.xlu0 3
  %2053 = vperm.xlu0 %2052, %v37
  %v2054 = vpop.permute.xlu0 %2053
  %2056 = vset.pattern.permute.xlu0 3
  %2057 = vperm.xlu0 %2056, %v38
  %v2058 = vpop.permute.xlu0 %2057
  %2060 = vset.pattern.permute.xlu0 3
  %2061 = vperm.xlu0 %2060, %v39
  %v2062 = vpop.permute.xlu0 %2061
  %2064 = vset.pattern.permute.xlu0 3
  %2065 = vperm.xlu0 %2064, %v40
  %v2066 = vpop.permute.xlu0 %2065
  %2068 = vset.pattern.permute.xlu0 3
  %2069 = vperm.xlu0 %2068, %v41
  %v2070 = vpop.permute.xlu0 %2069
  %2072 = vset.pattern.permute.xlu0 3
  %2073 = vperm.xlu0 %2072, %v42
  %v2074 = vpop.permute.xlu0 %2073
  %2076 = vset.pattern.permute.xlu0 3
  %2077 = vperm.xlu0 %2076, %v43
  %v2078 = vpop.permute.xlu0 %2077
  %2080 = vset.pattern.permute.xlu0 3
  %2081 = vperm.xlu0 %2080, %v44
  %v2082 = vpop.permute.xlu0 %2081
  %2084 = vset.pattern.permute.xlu0 3
  %2085 = vperm.xlu0 %2084, %v45
  %v2086 = vpop.permute.xlu0 %2085
  %2088 = vset.pattern.permute.xlu0 3
  %2089 = vperm.xlu0 %2088, %v46
  %v2090 = vpop.permute.xlu0 %2089
  %2092 = vset.pattern.permute.xlu0 3
  %2093 = vperm.xlu0 %2092, %v47
  %v2094 = vpop.permute.xlu0 %2093
  %2096 = vset.pattern.permute.xlu0 3
  %2097 = vperm.xlu0 %2096, %v48
  %v2098 = vpop.permute.xlu0 %2097
  %2100 = vset.pattern.permute.xlu0 3
  %2101 = vperm.xlu0 %2100, %v49
  %v2102 = vpop.permute.xlu0 %2101
  %v2104 = vperm.slane %v33, 3
  %v2105 = vadd.f32 %v2042, %v2104
  %v2106 = vadd.f32 %v2046, %v2104
  %v2107 = vadd.f32 %v2050, %v2104
  %v2108 = vadd.f32 %v2054, %v2104
  %v2109 = vadd.f32 %v2058, %v2104
  %v2110 = vadd.f32 %v2062, %v2104
  %v2111 = vadd.f32 %v2066, %v2104
  %v2112 = vadd.f32 %v2070, %v2104
  %v2113 = vadd.f32 %v2074, %v2104
  %v2114 = vadd.f32 %v2078, %v2104
  %v2115 = vadd.f32 %v2082, %v2104
  %v2116 = vadd.f32 %v2086, %v2104
  %v2117 = vadd.f32 %v2090, %v2104
  %v2118 = vadd.f32 %v2094, %v2104
  %v2119 = vadd.f32 %v2098, %v2104
  %v2120 = vadd.f32 %v2102, %v2104
  %v2121 = vmul.f32 %v2105, 0.01
  %v2122 = vmul.f32 %v2106, 0.01
  %v2123 = vmul.f32 %v2107, 0.01
  %v2124 = vmul.f32 %v2108, 0.01
  %v2125 = vmul.f32 %v2109, 0.01
  %v2126 = vmul.f32 %v2110, 0.01
  %v2127 = vmul.f32 %v2111, 0.01
  %v2128 = vmul.f32 %v2112, 0.01
  %v2129 = vmul.f32 %v2113, 0.01
  %v2130 = vmul.f32 %v2114, 0.01
  %v2131 = vmul.f32 %v2115, 0.01
  %v2132 = vmul.f32 %v2116, 0.01
  %v2133 = vmul.f32 %v2117, 0.01
  %v2134 = vmul.f32 %v2118, 0.01
  %v2135 = vmul.f32 %v2119, 0.01
  %v2136 = vmul.f32 %v2120, 0.01
  %v2137 = vmax.f32 %v2105, %v2121
  %v2138 = vmax.f32 %v2106, %v2122
  %v2139 = vmax.f32 %v2107, %v2123
  %v2140 = vmax.f32 %v2108, %v2124
  %v2141 = vmax.f32 %v2109, %v2125
  %v2142 = vmax.f32 %v2110, %v2126
  %v2143 = vmax.f32 %v2111, %v2127
  %v2144 = vmax.f32 %v2112, %v2128
  %v2145 = vmax.f32 %v2113, %v2129
  %v2146 = vmax.f32 %v2114, %v2130
  %v2147 = vmax.f32 %v2115, %v2131
  %v2148 = vmax.f32 %v2116, %v2132
  %v2149 = vmax.f32 %v2117, %v2133
  %v2150 = vmax.f32 %v2118, %v2134
  %v2151 = vmax.f32 %v2119, %v2135
  %v2152 = vmax.f32 %v2120, %v2136
  %v2153 = vadd.f32 %v2137, %v66
  %v2154 = vadd.f32 %v2138, %v67
  %v2155 = vadd.f32 %v2139, %v68
  %v2156 = vadd.f32 %v2140, %v69
  %v2157 = vadd.f32 %v2141, %v70
  %v2158 = vadd.f32 %v2142, %v71
  %v2159 = vadd.f32 %v2143, %v72
  %v2160 = vadd.f32 %v2144, %v73
  %v2161 = vadd.f32 %v2145, %v74
  %v2162 = vadd.f32 %v2146, %v75
  %v2163 = vadd.f32 %v2147, %v76
  %v2164 = vadd.f32 %v2148, %v77
  %v2165 = vadd.f32 %v2149, %v78
  %v2166 = vadd.f32 %v2150, %v79
  %v2167 = vadd.f32 %v2151, %v80
  %v2168 = vadd.f32 %v2152, %v81
  %2169 = vmax.xlane.f32.xlu0 %v2153
  %v2170 = vpop.xlane.xlu0 %2169
  %2171 = vmax.xlane.f32.xlu0 %v2154
  %v2172 = vpop.xlane.xlu0 %2171
  %2173 = vmax.xlane.f32.xlu0 %v2155
  %v2174 = vpop.xlane.xlu0 %2173
  %2175 = vmax.xlane.f32.xlu0 %v2156
  %v2176 = vpop.xlane.xlu0 %2175
  %2177 = vmax.xlane.f32.xlu0 %v2157
  %v2178 = vpop.xlane.xlu0 %2177
  %2179 = vmax.xlane.f32.xlu0 %v2158
  %v2180 = vpop.xlane.xlu0 %2179
  %2181 = vmax.xlane.f32.xlu0 %v2159
  %v2182 = vpop.xlane.xlu0 %2181
  %2183 = vmax.xlane.f32.xlu0 %v2160
  %v2184 = vpop.xlane.xlu0 %2183
  %2185 = vmax.xlane.f32.xlu0 %v2161
  %v2186 = vpop.xlane.xlu0 %2185
  %2187 = vmax.xlane.f32.xlu0 %v2162
  %v2188 = vpop.xlane.xlu0 %2187
  %2189 = vmax.xlane.f32.xlu0 %v2163
  %v2190 = vpop.xlane.xlu0 %2189
  %2191 = vmax.xlane.f32.xlu0 %v2164
  %v2192 = vpop.xlane.xlu0 %2191
  %2193 = vmax.xlane.f32.xlu0 %v2165
  %v2194 = vpop.xlane.xlu0 %2193
  %2195 = vmax.xlane.f32.xlu0 %v2166
  %v2196 = vpop.xlane.xlu0 %2195
  %2197 = vmax.xlane.f32.xlu0 %v2167
  %v2198 = vpop.xlane.xlu0 %2197
  %2199 = vmax.xlane.f32.xlu0 %v2168
  %v2200 = vpop.xlane.xlu0 %2199
  %vm2201 = vcmp.gt.f32.partialorder %v2170, -inf
  %vm2202 = vcmp.gt.f32.partialorder %v2172, -inf
  %vm2203 = vcmp.gt.f32.partialorder %v2174, -inf
  %vm2204 = vcmp.gt.f32.partialorder %v2176, -inf
  %vm2205 = vcmp.gt.f32.partialorder %v2178, -inf
  %vm2206 = vcmp.gt.f32.partialorder %v2180, -inf
  %vm2207 = vcmp.gt.f32.partialorder %v2182, -inf
  %vm2208 = vcmp.gt.f32.partialorder %v2184, -inf
  %vm2209 = vcmp.gt.f32.partialorder %v2186, -inf
  %vm2210 = vcmp.gt.f32.partialorder %v2188, -inf
  %vm2211 = vcmp.gt.f32.partialorder %v2190, -inf
  %vm2212 = vcmp.gt.f32.partialorder %v2192, -inf
  %vm2213 = vcmp.gt.f32.partialorder %v2194, -inf
  %vm2214 = vcmp.gt.f32.partialorder %v2196, -inf
  %vm2215 = vcmp.gt.f32.partialorder %v2198, -inf
  %vm2216 = vcmp.gt.f32.partialorder %v2200, -inf
  %v2217 = vsel %vm2201, %v2170, 0.0
  %v2218 = vsel %vm2202, %v2172, 0.0
  %v2219 = vsel %vm2203, %v2174, 0.0
  %v2220 = vsel %vm2204, %v2176, 0.0
  %v2221 = vsel %vm2205, %v2178, 0.0
  %v2222 = vsel %vm2206, %v2180, 0.0
  %v2223 = vsel %vm2207, %v2182, 0.0
  %v2224 = vsel %vm2208, %v2184, 0.0
  %v2225 = vsel %vm2209, %v2186, 0.0
  %v2226 = vsel %vm2210, %v2188, 0.0
  %v2227 = vsel %vm2211, %v2190, 0.0
  %v2228 = vsel %vm2212, %v2192, 0.0
  %v2229 = vsel %vm2213, %v2194, 0.0
  %v2230 = vsel %vm2214, %v2196, 0.0
  %v2231 = vsel %vm2215, %v2198, 0.0
  %v2232 = vsel %vm2216, %v2200, 0.0
  %v2233 = vsub.f32 %v2153, %v2217
  %v2234 = vsub.f32 %v2154, %v2218
  %v2235 = vsub.f32 %v2155, %v2219
  %v2236 = vsub.f32 %v2156, %v2220
  %v2237 = vsub.f32 %v2157, %v2221
  %v2238 = vsub.f32 %v2158, %v2222
  %v2239 = vsub.f32 %v2159, %v2223
  %v2240 = vsub.f32 %v2160, %v2224
  %v2241 = vsub.f32 %v2161, %v2225
  %v2242 = vsub.f32 %v2162, %v2226
  %v2243 = vsub.f32 %v2163, %v2227
  %v2244 = vsub.f32 %v2164, %v2228
  %v2245 = vsub.f32 %v2165, %v2229
  %v2246 = vsub.f32 %v2166, %v2230
  %v2247 = vsub.f32 %v2167, %v2231
  %v2248 = vsub.f32 %v2168, %v2232
  %v2249 = vmul.f32 %v2233, 1.442695
  %v2250 = vpow.pop %v2249
  %v2251 = vmul.f32 %v2234, 1.442695
  %v2252 = vpow.pop %v2251
  %v2253 = vmul.f32 %v2235, 1.442695
  %v2254 = vpow.pop %v2253
  %v2255 = vmul.f32 %v2236, 1.442695
  %v2256 = vpow.pop %v2255
  %v2257 = vmul.f32 %v2237, 1.442695
  %v2258 = vpow.pop %v2257
  %v2259 = vmul.f32 %v2238, 1.442695
  %v2260 = vpow.pop %v2259
  %v2261 = vmul.f32 %v2239, 1.442695
  %v2262 = vpow.pop %v2261
  %v2263 = vmul.f32 %v2240, 1.442695
  %v2264 = vpow.pop %v2263
  %v2265 = vmul.f32 %v2241, 1.442695
  %v2266 = vpow.pop %v2265
  %v2267 = vmul.f32 %v2242, 1.442695
  %v2268 = vpow.pop %v2267
  %v2269 = vmul.f32 %v2243, 1.442695
  %v2270 = vpow.pop %v2269
  %v2271 = vmul.f32 %v2244, 1.442695
  %v2272 = vpow.pop %v2271
  %v2273 = vmul.f32 %v2245, 1.442695
  %v2274 = vpow.pop %v2273
  %v2275 = vmul.f32 %v2246, 1.442695
  %v2276 = vpow.pop %v2275
  %v2277 = vmul.f32 %v2247, 1.442695
  %v2278 = vpow.pop %v2277
  %v2279 = vmul.f32 %v2248, 1.442695
  %v2280 = vpow.pop %v2279
  %2281 = vadd.xlane.f32.xlu0 %v2250
  %v2282 = vpop.xlane.xlu0 %2281
  %2283 = vadd.xlane.f32.xlu0 %v2252
  %v2284 = vpop.xlane.xlu0 %2283
  %2285 = vadd.xlane.f32.xlu0 %v2254
  %v2286 = vpop.xlane.xlu0 %2285
  %2287 = vadd.xlane.f32.xlu0 %v2256
  %v2288 = vpop.xlane.xlu0 %2287
  %2289 = vadd.xlane.f32.xlu0 %v2258
  %v2290 = vpop.xlane.xlu0 %2289
  %2291 = vadd.xlane.f32.xlu0 %v2260
  %v2292 = vpop.xlane.xlu0 %2291
  %2293 = vadd.xlane.f32.xlu0 %v2262
  %v2294 = vpop.xlane.xlu0 %2293
  %2295 = vadd.xlane.f32.xlu0 %v2264
  %v2296 = vpop.xlane.xlu0 %2295
  %2297 = vadd.xlane.f32.xlu0 %v2266
  %v2298 = vpop.xlane.xlu0 %2297
  %2299 = vadd.xlane.f32.xlu0 %v2268
  %v2300 = vpop.xlane.xlu0 %2299
  %2301 = vadd.xlane.f32.xlu0 %v2270
  %v2302 = vpop.xlane.xlu0 %2301
  %2303 = vadd.xlane.f32.xlu0 %v2272
  %v2304 = vpop.xlane.xlu0 %2303
  %2305 = vadd.xlane.f32.xlu0 %v2274
  %v2306 = vpop.xlane.xlu0 %2305
  %2307 = vadd.xlane.f32.xlu0 %v2276
  %v2308 = vpop.xlane.xlu0 %2307
  %2309 = vadd.xlane.f32.xlu0 %v2278
  %v2310 = vpop.xlane.xlu0 %2309
  %2311 = vadd.xlane.f32.xlu0 %v2280
  %v2312 = vpop.xlane.xlu0 %2311
  %vm2313 = vcmp.gt.f32.partialorder %v2282, 0.0
  %vm2314 = vcmp.gt.f32.partialorder %v2284, 0.0
  %vm2315 = vcmp.gt.f32.partialorder %v2286, 0.0
  %vm2316 = vcmp.gt.f32.partialorder %v2288, 0.0
  %vm2317 = vcmp.gt.f32.partialorder %v2290, 0.0
  %vm2318 = vcmp.gt.f32.partialorder %v2292, 0.0
  %vm2319 = vcmp.gt.f32.partialorder %v2294, 0.0
  %vm2320 = vcmp.gt.f32.partialorder %v2296, 0.0
  %vm2321 = vcmp.gt.f32.partialorder %v2298, 0.0
  %vm2322 = vcmp.gt.f32.partialorder %v2300, 0.0
  %vm2323 = vcmp.gt.f32.partialorder %v2302, 0.0
  %vm2324 = vcmp.gt.f32.partialorder %v2304, 0.0
  %vm2325 = vcmp.gt.f32.partialorder %v2306, 0.0
  %vm2326 = vcmp.gt.f32.partialorder %v2308, 0.0
  %vm2327 = vcmp.gt.f32.partialorder %v2310, 0.0
  %vm2328 = vcmp.gt.f32.partialorder %v2312, 0.0
  %v2329 = vsel %vm2313, %v2282, 1.0
  %v2330 = vsel %vm2314, %v2284, 1.0
  %v2331 = vsel %vm2315, %v2286, 1.0
  %v2332 = vsel %vm2316, %v2288, 1.0
  %v2333 = vsel %vm2317, %v2290, 1.0
  %v2334 = vsel %vm2318, %v2292, 1.0
  %v2335 = vsel %vm2319, %v2294, 1.0
  %v2336 = vsel %vm2320, %v2296, 1.0
  %v2337 = vsel %vm2321, %v2298, 1.0
  %v2338 = vsel %vm2322, %v2300, 1.0
  %v2339 = vsel %vm2323, %v2302, 1.0
  %v2340 = vsel %vm2324, %v2304, 1.0
  %v2341 = vsel %vm2325, %v2306, 1.0
  %v2342 = vsel %vm2326, %v2308, 1.0
  %v2343 = vsel %vm2327, %v2310, 1.0
  %v2344 = vsel %vm2328, %v2312, 1.0
  %2345 = vrot.lane.b32.xlu0 %v17, 80
  %v2346 = vpop.permute.xlu0 %2345
  %2347 = vrot.lane.b32.xlu0 %v18, 80
  %v2348 = vpop.permute.xlu0 %2347
  %2349 = vrot.lane.b32.xlu0 %v19, 80
  %v2350 = vpop.permute.xlu0 %2349
  %2351 = vrot.lane.b32.xlu0 %v20, 80
  %v2352 = vpop.permute.xlu0 %2351
  %2353 = vrot.lane.b32.xlu0 %v21, 80
  %v2354 = vpop.permute.xlu0 %2353
  %2355 = vrot.lane.b32.xlu0 %v22, 80
  %v2356 = vpop.permute.xlu0 %2355
  %2357 = vrot.lane.b32.xlu0 %v23, 80
  %v2358 = vpop.permute.xlu0 %2357
  %2359 = vrot.lane.b32.xlu0 %v24, 80
  %v2360 = vpop.permute.xlu0 %2359
  %2361 = vrot.lane.b32.xlu0 %v25, 80
  %v2362 = vpop.permute.xlu0 %2361
  %2363 = vrot.lane.b32.xlu0 %v26, 80
  %v2364 = vpop.permute.xlu0 %2363
  %2365 = vrot.lane.b32.xlu0 %v27, 80
  %v2366 = vpop.permute.xlu0 %2365
  %2367 = vrot.lane.b32.xlu0 %v28, 80
  %v2368 = vpop.permute.xlu0 %2367
  %2369 = vrot.lane.b32.xlu0 %v29, 80
  %v2370 = vpop.permute.xlu0 %2369
  %2371 = vrot.lane.b32.xlu0 %v30, 80
  %v2372 = vpop.permute.xlu0 %2371
  %2373 = vrot.lane.b32.xlu0 %v31, 80
  %v2374 = vpop.permute.xlu0 %2373
  %2375 = vrot.lane.b32.xlu0 %v32, 80
  %v2376 = vpop.permute.xlu0 %2375
  %2393 = vmatpush.msra.mxu0 %v2376
  %2394 = vmatpush.msra.mxu0 %v2374
  %2395 = vmatpush.msra.mxu0 %v2372
  %2396 = vmatpush.msra.mxu0 %v2370
  %2397 = vmatpush.msra.mxu0 %v2368
  %2398 = vmatpush.msra.mxu0 %v2366
  %2399 = vmatpush.msra.mxu0 %v2364
  %2400 = vmatpush.msra.mxu0 %v2362
  %2401 = vmatpush.msra.mxu0 %v2360
  %2402 = vmatpush.msra.mxu0 %v2358
  %2403 = vmatpush.msra.mxu0 %v2356
  %2404 = vmatpush.msra.mxu0 %v2354
  %2405 = vmatpush.msra.mxu0 %v2352
  %2406 = vmatpush.msra.mxu0 %v2350
  %2407 = vmatpush.msra.mxu0 %v2348
  %2408 = vmatpush.msra.mxu0 %v2346
  %2409 = vmatmul.f32.gmra.mxu0 %v2250
  %v2410 = vpop.f32.mrf.mxu0
  %v2411 = vadd.f32 0.0, %v2410
  %2412 = vmatmul.f32.gmra.mxu0 %v2252
  %v2413 = vpop.f32.mrf.mxu0
  %v2414 = vadd.f32 0.0, %v2413
  %2415 = vmatmul.f32.gmra.mxu0 %v2254
  %v2416 = vpop.f32.mrf.mxu0
  %v2417 = vadd.f32 0.0, %v2416
  %2418 = vmatmul.f32.gmra.mxu0 %v2256
  %v2419 = vpop.f32.mrf.mxu0
  %v2420 = vadd.f32 0.0, %v2419
  %2421 = vmatmul.f32.gmra.mxu0 %v2258
  %v2422 = vpop.f32.mrf.mxu0
  %v2423 = vadd.f32 0.0, %v2422
  %2424 = vmatmul.f32.gmra.mxu0 %v2260
  %v2425 = vpop.f32.mrf.mxu0
  %v2426 = vadd.f32 0.0, %v2425
  %2427 = vmatmul.f32.gmra.mxu0 %v2262
  %v2428 = vpop.f32.mrf.mxu0
  %v2429 = vadd.f32 0.0, %v2428
  %2430 = vmatmul.f32.gmra.mxu0 %v2264
  %v2431 = vpop.f32.mrf.mxu0
  %v2432 = vadd.f32 0.0, %v2431
  %2433 = vmatmul.f32.gmra.mxu0 %v2266
  %v2434 = vpop.f32.mrf.mxu0
  %v2435 = vadd.f32 0.0, %v2434
  %2436 = vmatmul.f32.gmra.mxu0 %v2268
  %v2437 = vpop.f32.mrf.mxu0
  %v2438 = vadd.f32 0.0, %v2437
  %2439 = vmatmul.f32.gmra.mxu0 %v2270
  %v2440 = vpop.f32.mrf.mxu0
  %v2441 = vadd.f32 0.0, %v2440
  %2442 = vmatmul.f32.gmra.mxu0 %v2272
  %v2443 = vpop.f32.mrf.mxu0
  %v2444 = vadd.f32 0.0, %v2443
  %2445 = vmatmul.f32.gmra.mxu0 %v2274
  %v2446 = vpop.f32.mrf.mxu0
  %v2447 = vadd.f32 0.0, %v2446
  %2448 = vmatmul.f32.gmra.mxu0 %v2276
  %v2449 = vpop.f32.mrf.mxu0
  %v2450 = vadd.f32 0.0, %v2449
  %2451 = vmatmul.f32.gmra.mxu0 %v2278
  %v2452 = vpop.f32.mrf.mxu0
  %v2453 = vadd.f32 0.0, %v2452
  %2454 = vmatmul.f32.gmra.mxu0 %v2280
  %v2455 = vpop.f32.mrf.mxu0
  %v2456 = vadd.f32 0.0, %v2455
  %2457 = vdwg.mxu0
  %v2458 = vrcp.pop %v2329
  %v2459 = vmul.f32 %v2329, %v2458
  %v2460 = vsub.f32 1.0, %v2459
  %v2461 = vmul.f32 %v2458, %v2460
  %v2462 = vadd.f32 %v2458, %v2461
  %vm2463 = vweird.f32 %v2329
  %vm2464 = vweird.f32 %v2458
  %vm2465 = vmor %vm2463, %vm2464
  %v2466 = vsel %vm2465, %v2458, %v2462
  %v2467 = vand.u32 2147483647, %v2329
  %vm2468 = vcmp.eq.f32.partialorder %v2467, 8.507059e+37
  %v2469 = vand.u32 %v2329, 2147483648
  %v2470 = vor.u32 1.1754944e-38, %v2469
  %v2471 = vsel %vm2468, %v2470, %v2466
  %v2472 = vmul.f32 %v2411, %v2471
  %v2473 = vrcp.pop %v2330
  %v2474 = vmul.f32 %v2330, %v2473
  %v2475 = vsub.f32 1.0, %v2474
  %v2476 = vmul.f32 %v2473, %v2475
  %v2477 = vadd.f32 %v2473, %v2476
  %vm2478 = vweird.f32 %v2330
  %vm2479 = vweird.f32 %v2473
  %vm2480 = vmor %vm2478, %vm2479
  %v2481 = vsel %vm2480, %v2473, %v2477
  %v2482 = vand.u32 2147483647, %v2330
  %vm2483 = vcmp.eq.f32.partialorder %v2482, 8.507059e+37
  %v2484 = vand.u32 %v2330, 2147483648
  %v2485 = vor.u32 1.1754944e-38, %v2484
  %v2486 = vsel %vm2483, %v2485, %v2481
  %v2487 = vmul.f32 %v2414, %v2486
  %v2488 = vrcp.pop %v2331
  %v2489 = vmul.f32 %v2331, %v2488
  %v2490 = vsub.f32 1.0, %v2489
  %v2491 = vmul.f32 %v2488, %v2490
  %v2492 = vadd.f32 %v2488, %v2491
  %vm2493 = vweird.f32 %v2331
  %vm2494 = vweird.f32 %v2488
  %vm2495 = vmor %vm2493, %vm2494
  %v2496 = vsel %vm2495, %v2488, %v2492
  %v2497 = vand.u32 2147483647, %v2331
  %vm2498 = vcmp.eq.f32.partialorder %v2497, 8.507059e+37
  %v2499 = vand.u32 %v2331, 2147483648
  %v2500 = vor.u32 1.1754944e-38, %v2499
  %v2501 = vsel %vm2498, %v2500, %v2496
  %v2502 = vmul.f32 %v2417, %v2501
  %v2503 = vrcp.pop %v2332
  %v2504 = vmul.f32 %v2332, %v2503
  %v2505 = vsub.f32 1.0, %v2504
  %v2506 = vmul.f32 %v2503, %v2505
  %v2507 = vadd.f32 %v2503, %v2506
  %vm2508 = vweird.f32 %v2332
  %vm2509 = vweird.f32 %v2503
  %vm2510 = vmor %vm2508, %vm2509
  %v2511 = vsel %vm2510, %v2503, %v2507
  %v2512 = vand.u32 2147483647, %v2332
  %vm2513 = vcmp.eq.f32.partialorder %v2512, 8.507059e+37
  %v2514 = vand.u32 %v2332, 2147483648
  %v2515 = vor.u32 1.1754944e-38, %v2514
  %v2516 = vsel %vm2513, %v2515, %v2511
  %v2517 = vmul.f32 %v2420, %v2516
  %v2518 = vrcp.pop %v2333
  %v2519 = vmul.f32 %v2333, %v2518
  %v2520 = vsub.f32 1.0, %v2519
  %v2521 = vmul.f32 %v2518, %v2520
  %v2522 = vadd.f32 %v2518, %v2521
  %vm2523 = vweird.f32 %v2333
  %vm2524 = vweird.f32 %v2518
  %vm2525 = vmor %vm2523, %vm2524
  %v2526 = vsel %vm2525, %v2518, %v2522
  %v2527 = vand.u32 2147483647, %v2333
  %vm2528 = vcmp.eq.f32.partialorder %v2527, 8.507059e+37
  %v2529 = vand.u32 %v2333, 2147483648
  %v2530 = vor.u32 1.1754944e-38, %v2529
  %v2531 = vsel %vm2528, %v2530, %v2526
  %v2532 = vmul.f32 %v2423, %v2531
  %v2533 = vrcp.pop %v2334
  %v2534 = vmul.f32 %v2334, %v2533
  %v2535 = vsub.f32 1.0, %v2534
  %v2536 = vmul.f32 %v2533, %v2535
  %v2537 = vadd.f32 %v2533, %v2536
  %vm2538 = vweird.f32 %v2334
  %vm2539 = vweird.f32 %v2533
  %vm2540 = vmor %vm2538, %vm2539
  %v2541 = vsel %vm2540, %v2533, %v2537
  %v2542 = vand.u32 2147483647, %v2334
  %vm2543 = vcmp.eq.f32.partialorder %v2542, 8.507059e+37
  %v2544 = vand.u32 %v2334, 2147483648
  %v2545 = vor.u32 1.1754944e-38, %v2544
  %v2546 = vsel %vm2543, %v2545, %v2541
  %v2547 = vmul.f32 %v2426, %v2546
  %v2548 = vrcp.pop %v2335
  %v2549 = vmul.f32 %v2335, %v2548
  %v2550 = vsub.f32 1.0, %v2549
  %v2551 = vmul.f32 %v2548, %v2550
  %v2552 = vadd.f32 %v2548, %v2551
  %vm2553 = vweird.f32 %v2335
  %vm2554 = vweird.f32 %v2548
  %vm2555 = vmor %vm2553, %vm2554
  %v2556 = vsel %vm2555, %v2548, %v2552
  %v2557 = vand.u32 2147483647, %v2335
  %vm2558 = vcmp.eq.f32.partialorder %v2557, 8.507059e+37
  %v2559 = vand.u32 %v2335, 2147483648
  %v2560 = vor.u32 1.1754944e-38, %v2559
  %v2561 = vsel %vm2558, %v2560, %v2556
  %v2562 = vmul.f32 %v2429, %v2561
  %v2563 = vrcp.pop %v2336
  %v2564 = vmul.f32 %v2336, %v2563
  %v2565 = vsub.f32 1.0, %v2564
  %v2566 = vmul.f32 %v2563, %v2565
  %v2567 = vadd.f32 %v2563, %v2566
  %vm2568 = vweird.f32 %v2336
  %vm2569 = vweird.f32 %v2563
  %vm2570 = vmor %vm2568, %vm2569
  %v2571 = vsel %vm2570, %v2563, %v2567
  %v2572 = vand.u32 2147483647, %v2336
  %vm2573 = vcmp.eq.f32.partialorder %v2572, 8.507059e+37
  %v2574 = vand.u32 %v2336, 2147483648
  %v2575 = vor.u32 1.1754944e-38, %v2574
  %v2576 = vsel %vm2573, %v2575, %v2571
  %v2577 = vmul.f32 %v2432, %v2576
  %v2578 = vrcp.pop %v2337
  %v2579 = vmul.f32 %v2337, %v2578
  %v2580 = vsub.f32 1.0, %v2579
  %v2581 = vmul.f32 %v2578, %v2580
  %v2582 = vadd.f32 %v2578, %v2581
  %vm2583 = vweird.f32 %v2337
  %vm2584 = vweird.f32 %v2578
  %vm2585 = vmor %vm2583, %vm2584
  %v2586 = vsel %vm2585, %v2578, %v2582
  %v2587 = vand.u32 2147483647, %v2337
  %vm2588 = vcmp.eq.f32.partialorder %v2587, 8.507059e+37
  %v2589 = vand.u32 %v2337, 2147483648
  %v2590 = vor.u32 1.1754944e-38, %v2589
  %v2591 = vsel %vm2588, %v2590, %v2586
  %v2592 = vmul.f32 %v2435, %v2591
  %v2593 = vrcp.pop %v2338
  %v2594 = vmul.f32 %v2338, %v2593
  %v2595 = vsub.f32 1.0, %v2594
  %v2596 = vmul.f32 %v2593, %v2595
  %v2597 = vadd.f32 %v2593, %v2596
  %vm2598 = vweird.f32 %v2338
  %vm2599 = vweird.f32 %v2593
  %vm2600 = vmor %vm2598, %vm2599
  %v2601 = vsel %vm2600, %v2593, %v2597
  %v2602 = vand.u32 2147483647, %v2338
  %vm2603 = vcmp.eq.f32.partialorder %v2602, 8.507059e+37
  %v2604 = vand.u32 %v2338, 2147483648
  %v2605 = vor.u32 1.1754944e-38, %v2604
  %v2606 = vsel %vm2603, %v2605, %v2601
  %v2607 = vmul.f32 %v2438, %v2606
  %v2608 = vrcp.pop %v2339
  %v2609 = vmul.f32 %v2339, %v2608
  %v2610 = vsub.f32 1.0, %v2609
  %v2611 = vmul.f32 %v2608, %v2610
  %v2612 = vadd.f32 %v2608, %v2611
  %vm2613 = vweird.f32 %v2339
  %vm2614 = vweird.f32 %v2608
  %vm2615 = vmor %vm2613, %vm2614
  %v2616 = vsel %vm2615, %v2608, %v2612
  %v2617 = vand.u32 2147483647, %v2339
  %vm2618 = vcmp.eq.f32.partialorder %v2617, 8.507059e+37
  %v2619 = vand.u32 %v2339, 2147483648
  %v2620 = vor.u32 1.1754944e-38, %v2619
  %v2621 = vsel %vm2618, %v2620, %v2616
  %v2622 = vmul.f32 %v2441, %v2621
  %v2623 = vrcp.pop %v2340
  %v2624 = vmul.f32 %v2340, %v2623
  %v2625 = vsub.f32 1.0, %v2624
  %v2626 = vmul.f32 %v2623, %v2625
  %v2627 = vadd.f32 %v2623, %v2626
  %vm2628 = vweird.f32 %v2340
  %vm2629 = vweird.f32 %v2623
  %vm2630 = vmor %vm2628, %vm2629
  %v2631 = vsel %vm2630, %v2623, %v2627
  %v2632 = vand.u32 2147483647, %v2340
  %vm2633 = vcmp.eq.f32.partialorder %v2632, 8.507059e+37
  %v2634 = vand.u32 %v2340, 2147483648
  %v2635 = vor.u32 1.1754944e-38, %v2634
  %v2636 = vsel %vm2633, %v2635, %v2631
  %v2637 = vmul.f32 %v2444, %v2636
  %v2638 = vrcp.pop %v2341
  %v2639 = vmul.f32 %v2341, %v2638
  %v2640 = vsub.f32 1.0, %v2639
  %v2641 = vmul.f32 %v2638, %v2640
  %v2642 = vadd.f32 %v2638, %v2641
  %vm2643 = vweird.f32 %v2341
  %vm2644 = vweird.f32 %v2638
  %vm2645 = vmor %vm2643, %vm2644
  %v2646 = vsel %vm2645, %v2638, %v2642
  %v2647 = vand.u32 2147483647, %v2341
  %vm2648 = vcmp.eq.f32.partialorder %v2647, 8.507059e+37
  %v2649 = vand.u32 %v2341, 2147483648
  %v2650 = vor.u32 1.1754944e-38, %v2649
  %v2651 = vsel %vm2648, %v2650, %v2646
  %v2652 = vmul.f32 %v2447, %v2651
  %v2653 = vrcp.pop %v2342
  %v2654 = vmul.f32 %v2342, %v2653
  %v2655 = vsub.f32 1.0, %v2654
  %v2656 = vmul.f32 %v2653, %v2655
  %v2657 = vadd.f32 %v2653, %v2656
  %vm2658 = vweird.f32 %v2342
  %vm2659 = vweird.f32 %v2653
  %vm2660 = vmor %vm2658, %vm2659
  %v2661 = vsel %vm2660, %v2653, %v2657
  %v2662 = vand.u32 2147483647, %v2342
  %vm2663 = vcmp.eq.f32.partialorder %v2662, 8.507059e+37
  %v2664 = vand.u32 %v2342, 2147483648
  %v2665 = vor.u32 1.1754944e-38, %v2664
  %v2666 = vsel %vm2663, %v2665, %v2661
  %v2667 = vmul.f32 %v2450, %v2666
  %v2668 = vrcp.pop %v2343
  %v2669 = vmul.f32 %v2343, %v2668
  %v2670 = vsub.f32 1.0, %v2669
  %v2671 = vmul.f32 %v2668, %v2670
  %v2672 = vadd.f32 %v2668, %v2671
  %vm2673 = vweird.f32 %v2343
  %vm2674 = vweird.f32 %v2668
  %vm2675 = vmor %vm2673, %vm2674
  %v2676 = vsel %vm2675, %v2668, %v2672
  %v2677 = vand.u32 2147483647, %v2343
  %vm2678 = vcmp.eq.f32.partialorder %v2677, 8.507059e+37
  %v2679 = vand.u32 %v2343, 2147483648
  %v2680 = vor.u32 1.1754944e-38, %v2679
  %v2681 = vsel %vm2678, %v2680, %v2676
  %v2682 = vmul.f32 %v2453, %v2681
  %v2683 = vrcp.pop %v2344
  %v2684 = vmul.f32 %v2344, %v2683
  %v2685 = vsub.f32 1.0, %v2684
  %v2686 = vmul.f32 %v2683, %v2685
  %v2687 = vadd.f32 %v2683, %v2686
  %vm2688 = vweird.f32 %v2344
  %vm2689 = vweird.f32 %v2683
  %vm2690 = vmor %vm2688, %vm2689
  %v2691 = vsel %vm2690, %v2683, %v2687
  %v2692 = vand.u32 2147483647, %v2344
  %vm2693 = vcmp.eq.f32.partialorder %v2692, 8.507059e+37
  %v2694 = vand.u32 %v2344, 2147483648
  %v2695 = vor.u32 1.1754944e-38, %v2694
  %v2696 = vsel %vm2693, %v2695, %v2691
  %v2697 = vmul.f32 %v2456, %v2696
  %2714 = vrot.lane.b32.xlu0 %v1156, 16
  %v2715 = vpop.permute.xlu0 %2714
  %2716 = vrot.lane.b32.xlu0 %v1171, 16
  %v2717 = vpop.permute.xlu0 %2716
  %2718 = vrot.lane.b32.xlu0 %v1186, 16
  %v2719 = vpop.permute.xlu0 %2718
  %2720 = vrot.lane.b32.xlu0 %v1201, 16
  %v2721 = vpop.permute.xlu0 %2720
  %2722 = vrot.lane.b32.xlu0 %v1216, 16
  %v2723 = vpop.permute.xlu0 %2722
  %2724 = vrot.lane.b32.xlu0 %v1231, 16
  %v2725 = vpop.permute.xlu0 %2724
  %2726 = vrot.lane.b32.xlu0 %v1246, 16
  %v2727 = vpop.permute.xlu0 %2726
  %2728 = vrot.lane.b32.xlu0 %v1261, 16
  %v2729 = vpop.permute.xlu0 %2728
  %2730 = vrot.lane.b32.xlu0 %v1276, 16
  %v2731 = vpop.permute.xlu0 %2730
  %2732 = vrot.lane.b32.xlu0 %v1291, 16
  %v2733 = vpop.permute.xlu0 %2732
  %2734 = vrot.lane.b32.xlu0 %v1306, 16
  %v2735 = vpop.permute.xlu0 %2734
  %2736 = vrot.lane.b32.xlu0 %v1321, 16
  %v2737 = vpop.permute.xlu0 %2736
  %2738 = vrot.lane.b32.xlu0 %v1336, 16
  %v2739 = vpop.permute.xlu0 %2738
  %2740 = vrot.lane.b32.xlu0 %v1351, 16
  %v2741 = vpop.permute.xlu0 %2740
  %2742 = vrot.lane.b32.xlu0 %v1366, 16
  %v2743 = vpop.permute.xlu0 %2742
  %2744 = vrot.lane.b32.xlu0 %v1381, 16
  %v2745 = vpop.permute.xlu0 %2744
  %2778 = vrot.lane.b32.xlu0 %v1814, 32
  %v2779 = vpop.permute.xlu0 %2778
  %2780 = vrot.lane.b32.xlu0 %v1829, 32
  %v2781 = vpop.permute.xlu0 %2780
  %2782 = vrot.lane.b32.xlu0 %v1844, 32
  %v2783 = vpop.permute.xlu0 %2782
  %2784 = vrot.lane.b32.xlu0 %v1859, 32
  %v2785 = vpop.permute.xlu0 %2784
  %2786 = vrot.lane.b32.xlu0 %v1874, 32
  %v2787 = vpop.permute.xlu0 %2786
  %2788 = vrot.lane.b32.xlu0 %v1889, 32
  %v2789 = vpop.permute.xlu0 %2788
  %2790 = vrot.lane.b32.xlu0 %v1904, 32
  %v2791 = vpop.permute.xlu0 %2790
  %2792 = vrot.lane.b32.xlu0 %v1919, 32
  %v2793 = vpop.permute.xlu0 %2792
  %2794 = vrot.lane.b32.xlu0 %v1934, 32
  %v2795 = vpop.permute.xlu0 %2794
  %2796 = vrot.lane.b32.xlu0 %v1949, 32
  %v2797 = vpop.permute.xlu0 %2796
  %2798 = vrot.lane.b32.xlu0 %v1964, 32
  %v2799 = vpop.permute.xlu0 %2798
  %2800 = vrot.lane.b32.xlu0 %v1979, 32
  %v2801 = vpop.permute.xlu0 %2800
  %2802 = vrot.lane.b32.xlu0 %v1994, 32
  %v2803 = vpop.permute.xlu0 %2802
  %2804 = vrot.lane.b32.xlu0 %v2009, 32
  %v2805 = vpop.permute.xlu0 %2804
  %2806 = vrot.lane.b32.xlu0 %v2024, 32
  %v2807 = vpop.permute.xlu0 %2806
  %2808 = vrot.lane.b32.xlu0 %v2039, 32
  %v2809 = vpop.permute.xlu0 %2808
  %2842 = vrot.lane.b32.xlu0 %v2472, 48
  %v2843 = vpop.permute.xlu0 %2842
  %2844 = vrot.lane.b32.xlu0 %v2487, 48
  %v2845 = vpop.permute.xlu0 %2844
  %2846 = vrot.lane.b32.xlu0 %v2502, 48
  %v2847 = vpop.permute.xlu0 %2846
  %2848 = vrot.lane.b32.xlu0 %v2517, 48
  %v2849 = vpop.permute.xlu0 %2848
  %2850 = vrot.lane.b32.xlu0 %v2532, 48
  %v2851 = vpop.permute.xlu0 %2850
  %2852 = vrot.lane.b32.xlu0 %v2547, 48
  %v2853 = vpop.permute.xlu0 %2852
  %2854 = vrot.lane.b32.xlu0 %v2562, 48
  %v2855 = vpop.permute.xlu0 %2854
  %2856 = vrot.lane.b32.xlu0 %v2577, 48
  %v2857 = vpop.permute.xlu0 %2856
  %2858 = vrot.lane.b32.xlu0 %v2592, 48
  %v2859 = vpop.permute.xlu0 %2858
  %2860 = vrot.lane.b32.xlu0 %v2607, 48
  %v2861 = vpop.permute.xlu0 %2860
  %2862 = vrot.lane.b32.xlu0 %v2622, 48
  %v2863 = vpop.permute.xlu0 %2862
  %2864 = vrot.lane.b32.xlu0 %v2637, 48
  %v2865 = vpop.permute.xlu0 %2864
  %2866 = vrot.lane.b32.xlu0 %v2652, 48
  %v2867 = vpop.permute.xlu0 %2866
  %2868 = vrot.lane.b32.xlu0 %v2667, 48
  %v2869 = vpop.permute.xlu0 %2868
  %2870 = vrot.lane.b32.xlu0 %v2682, 48
  %v2871 = vpop.permute.xlu0 %2870
  %2872 = vrot.lane.b32.xlu0 %v2697, 48
  %v2873 = vpop.permute.xlu0 %2872
  %vm2890 = vcmask 130048
  %v2891 = vsel %vm2890, %v482, %v2715
  %v2892 = vsel %vm2890, %v497, %v2717
  %v2893 = vsel %vm2890, %v512, %v2719
  %v2894 = vsel %vm2890, %v527, %v2721
  %v2895 = vsel %vm2890, %v542, %v2723
  %v2896 = vsel %vm2890, %v557, %v2725
  %v2897 = vsel %vm2890, %v572, %v2727
  %v2898 = vsel %vm2890, %v587, %v2729
  %v2899 = vsel %vm2890, %v602, %v2731
  %v2900 = vsel %vm2890, %v617, %v2733
  %v2901 = vsel %vm2890, %v632, %v2735
  %v2902 = vsel %vm2890, %v647, %v2737
  %v2903 = vsel %vm2890, %v662, %v2739
  %v2904 = vsel %vm2890, %v677, %v2741
  %v2905 = vsel %vm2890, %v692, %v2743
  %v2906 = vsel %vm2890, %v707, %v2745
  %vm2907 = vcmask 261120
  %v2908 = vsel %vm2907, %v2891, %v2779
  %v2909 = vsel %vm2907, %v2892, %v2781
  %v2910 = vsel %vm2907, %v2893, %v2783
  %v2911 = vsel %vm2907, %v2894, %v2785
  %v2912 = vsel %vm2907, %v2895, %v2787
  %v2913 = vsel %vm2907, %v2896, %v2789
  %v2914 = vsel %vm2907, %v2897, %v2791
  %v2915 = vsel %vm2907, %v2898, %v2793
  %v2916 = vsel %vm2907, %v2899, %v2795
  %v2917 = vsel %vm2907, %v2900, %v2797
  %v2918 = vsel %vm2907, %v2901, %v2799
  %v2919 = vsel %vm2907, %v2902, %v2801
  %v2920 = vsel %vm2907, %v2903, %v2803
  %v2921 = vsel %vm2907, %v2904, %v2805
  %v2922 = vsel %vm2907, %v2905, %v2807
  %v2923 = vsel %vm2907, %v2906, %v2809
  %vm2924 = vcmask 392192
  %v2925 = vsel %vm2924, %v2908, %v2843
  %v2926 = vsel %vm2924, %v2909, %v2845
  %v2927 = vsel %vm2924, %v2910, %v2847
  %v2928 = vsel %vm2924, %v2911, %v2849
  %v2929 = vsel %vm2924, %v2912, %v2851
  %v2930 = vsel %vm2924, %v2913, %v2853
  %v2931 = vsel %vm2924, %v2914, %v2855
  %v2932 = vsel %vm2924, %v2915, %v2857
  %v2933 = vsel %vm2924, %v2916, %v2859
  %v2934 = vsel %vm2924, %v2917, %v2861
  %v2935 = vsel %vm2924, %v2918, %v2863
  %v2936 = vsel %vm2924, %v2919, %v2865
  %v2937 = vsel %vm2924, %v2920, %v2867
  %v2938 = vsel %vm2924, %v2921, %v2869
  %v2939 = vsel %vm2924, %v2922, %v2871
  %v2940 = vsel %vm2924, %v2923, %v2873
  %vm2941 = vcmask 523264
  %2942 = vst.msk [vmem:[%s4] sm:$0xff] %vm2941, %v2925
  %2943 = vst.msk [vmem:[%s4 + $0x8] sm:$0xff] %vm2941, %v2926
  %2944 = vst.msk [vmem:[%s4 + $0x10] sm:$0xff] %vm2941, %v2927
  %2945 = vst.msk [vmem:[%s4 + $0x18] sm:$0xff] %vm2941, %v2928
  %2946 = vst.msk [vmem:[%s4 + $0x20] sm:$0xff] %vm2941, %v2929
  %2947 = vst.msk [vmem:[%s4 + $0x28] sm:$0xff] %vm2941, %v2930
  %2948 = vst.msk [vmem:[%s4 + $0x30] sm:$0xff] %vm2941, %v2931
  %2949 = vst.msk [vmem:[%s4 + $0x38] sm:$0xff] %vm2941, %v2932
  %2950 = vst.msk [vmem:[%s4 + $0x40] sm:$0xff] %vm2941, %v2933
  %2951 = vst.msk [vmem:[%s4 + $0x48] sm:$0xff] %vm2941, %v2934
  %2952 = vst.msk [vmem:[%s4 + $0x50] sm:$0xff] %vm2941, %v2935
  %2953 = vst.msk [vmem:[%s4 + $0x58] sm:$0xff] %vm2941, %v2936
  %2954 = vst.msk [vmem:[%s4 + $0x60] sm:$0xff] %vm2941, %v2937
  %2955 = vst.msk [vmem:[%s4 + $0x68] sm:$0xff] %vm2941, %v2938
  %2956 = vst.msk [vmem:[%s4 + $0x70] sm:$0xff] %vm2941, %v2939
  %2957 = vst.msk [vmem:[%s4 + $0x78] sm:$0xff] %vm2941, %v2940
  // Predicated region
  $region18: #{multi_head_gat.1} parent=0 // pred_check
    _
  $region19: #{multi_head_gat.1} parent=0 // pred_check_branch
    %2959 = sbr.rel (0) target = $region21
  $region20: #{multi_head_gat.1} parent=0 // pred_region
    _
  $region21: #{multi_head_gat.1} parent=0 // pred_fallthru
    _
  // Predicated region
  $region22: #{multi_head_gat.1} parent=0 // pred_check
    _
  $region23: #{multi_head_gat.1} parent=0 // pred_check_branch
    %2961 = sbr.rel (0) target = $region25
  $region24: #{multi_head_gat.1} parent=0 // pred_region
    _
  $region25: #{multi_head_gat.1} parent=0 // pred_fallthru
    _

</llo_original>
